<compile_context>
chip_gen: v7x
topology: tpu7x:2x2x1
jax: 0.10.0
libtpu: 0.0.40
codegen_flags: <defaults>
</compile_context>

<pallas_src>
import functools

import jax
import jax.numpy as jnp
import numpy as np
from jax import lax
from jax.experimental import pallas as pl
from jax.experimental.pallas import tpu as pltpu


# --------------------------- fused Tail kernel ------------------------------
def _tail_kernel(x_ref, w_res_ref, b_res_ref, w_fin_ref, b_fin_ref, out_ref,
                 act_ref, *, H, W, Cin, Cout, block_num, nb, mxu_dtype):
    """Nb images per grid step; all convs of the Tail fused.

    x_ref     : (nb, H, W*Cin)                      lane-packed input   (VMEM)
    w_res_ref : (block_num, 2, 3, W*Cin, W*Cin)     banded ResBlock weights
    b_res_ref : (block_num, 2, 1, W*Cin)            W-tiled ResBlock biases
    w_fin_ref : (3, W*Cin, W*Cout)                  banded final-conv weight
    b_fin_ref : (1, W*Cout)                         W-tiled final-conv bias
    out_ref   : (nb, H, W*Cout)                     lane-packed output
    act_ref   : (nb, H+2, W*Cin) f32                activation + vertical halo
    """
    WC = W * Cin
    M = nb * H

    # Vertical SAME padding: zero only the two halo rows (the interior is
    # fully overwritten each conv).  Horizontal SAME padding is encoded in
    # the banded weights, so no horizontal halo / roll / mask is needed.
    act_ref[:, 0:1, :] = jnp.zeros((nb, 1, WC), jnp.float32)
    act_ref[:, H + 1:H + 2, :] = jnp.zeros((nb, 1, WC), jnp.float32)
    act_ref[:, 1:H + 1, :] = x_ref[...].astype(jnp.float32)

    def conv3x3(get_w, bias):
        """3x3 SAME conv on the current activation; returns (M, n_out) f32."""
        n_out = bias.shape[-1]
        acc = jnp.zeros((M, n_out), jnp.float32)
        for ky in range(3):                              # 3 lane-dense dots
            slab = act_ref[:, ky:ky + H, :].reshape(M, WC)
            acc = acc + jnp.dot(slab.astype(mxu_dtype),
                                get_w(ky).astype(mxu_dtype),
                                preferred_element_type=jnp.float32)
        return acc + bias                                # bias stays f32

    def block_body(blk, carry):
        # Block input is the current activation -> it is also the residual.
        res = act_ref[:, 1:H + 1, :].reshape(M, WC)
        h = conv3x3(lambda ky: w_res_ref[blk, 0, ky, :, :],
                    b_res_ref[blk, 0, :, :])
        h = jnp.maximum(h, 0.0)                          # conv1 + ReLU (f32)
        act_ref[:, 1:H + 1, :] = h.reshape(nb, H, WC)
        y = conv3x3(lambda ky: w_res_ref[blk, 1, ky, :, :],
                    b_res_ref[blk, 1, :, :]) + res       # conv2 + skip
        act_ref[:, 1:H + 1, :] = y.reshape(nb, H, WC)
        return carry

    lax.fori_loop(0, block_num, block_body, 0, unroll=False)

    out = conv3x3(lambda ky: w_fin_ref[ky, :, :], b_fin_ref[...])
    out_ref[...] = out.reshape(nb, H, W * Cout).astype(out_ref.dtype)


# --------------------------- weight packing ---------------------------------
def _pack_banded(w_hwio, W):
    """HWIO (3,3,Cin,Cout) -> (3, W*Cin, W*Cout) block-banded matrices.

    Wband[ky][xi*Cin+ci, xo*Cout+co] = w[ky, xi-xo+1, ci, co] for |xi-xo|<=1,
    zero otherwise -> horizontal SAME padding is built into the matrix.
    """
    w = np.asarray(w_hwio, dtype=np.float32)
    _, _, cin, cout = w.shape
    out = np.zeros((3, W * cin, W * cout), np.float32)
    for ky in range(3):
        for kx in range(3):
            for xo in range(W):
                xi = xo + kx - 1
                if 0 <= xi < W:
                    out[ky, xi * cin:(xi + 1) * cin,
                        xo * cout:(xo + 1) * cout] = w[ky, kx]
    return out


def _tile_bias(b, W):
    return np.tile(np.asarray(b, np.float32), W)[None, :]   # (1, W*Cout)


# --------------------------- wrapper -----------------------------------------
def tail_forward_pallas(x_nhwc, params, *, batch_tile=None,
                        mxu_dtype=jnp.float32):
    """x_nhwc: (N,H,W,Cin). Returns NHWC output of the fused Tail."""
    N, H, W, Cin = x_nhwc.shape
    block_num = len(params["res_blocks"])
    wf, bf = params["final"]
    Cout = wf.shape[-1]
    WC, WCo = W * Cin, W * Cout

    # Images per grid step: keep the parallel grid >= 2 when possible (v7x
    # has 2 TensorCores); raise batch_tile on v5e/v6e for bigger blocks.
    nb = batch_tile if batch_tile is not None else (1 if N < 4 else 2)
    if N % nb != 0:
        nb = 1

    # Pack weights (banded, lane-dense) and biases (W-tiled rows).
    w_res = jnp.asarray(np.stack([
        np.stack([_pack_banded(w1, W), _pack_banded(w2, W)])
        for (w1, b1, w2, b2) in params["res_blocks"]]),
        dtype=mxu_dtype)                                   # (B, 2, 3, WC, WC)
    b_res = jnp.asarray(np.stack([
        np.stack([_tile_bias(b1, W), _tile_bias(b2, W)])
        for (w1, b1, w2, b2) in params["res_blocks"]]))    # (B, 2, 1, WC) f32
    w_fin = jnp.asarray(_pack_banded(wf, W), dtype=mxu_dtype)  # (3, WC, WCo)
    b_fin = jnp.asarray(_tile_bias(bf, W))                     # (1, WCo)

    x_packed = x_nhwc.reshape(N, H, WC)                    # lane-dense input

    kern = functools.partial(_tail_kernel, H=H, W=W, Cin=Cin, Cout=Cout,
                             block_num=block_num, nb=nb, mxu_dtype=mxu_dtype)

    out_packed = pl.pallas_call(
        kern,
        out_shape=jax.ShapeDtypeStruct((N, H, WCo), x_nhwc.dtype),
        grid_spec=pltpu.PrefetchScalarGridSpec(
            num_scalar_prefetch=0,
            grid=(N // nb,),
            in_specs=[
                pl.BlockSpec((nb, H, WC), lambda n: (n, 0, 0)),
                # Weights/biases: constant index_map -> resident in VMEM.
                pl.BlockSpec((block_num, 2, 3, WC, WC),
                             lambda n: (0, 0, 0, 0, 0)),
                pl.BlockSpec((block_num, 2, 1, WC),
                             lambda n: (0, 0, 0, 0)),
                pl.BlockSpec((3, WC, WCo), lambda n: (0, 0, 0)),
                pl.BlockSpec((1, WCo), lambda n: (0, 0)),
            ],
            out_specs=pl.BlockSpec((nb, H, WCo), lambda n: (n, 0, 0)),
            scratch_shapes=[
                pltpu.VMEM((nb, H + 2, WC), jnp.float32),  # padded activation
            ]),
        compiler_params=pltpu.CompilerParams(
            dimension_semantics=("parallel",),
            vmem_limit_bytes=32 * 1024 * 1024),
    )(x_packed, w_res, b_res, w_fin, b_fin)

    return out_packed.reshape(N, H, W, Cout)


# ---------------- pure-JAX reference (for correctness check) ----------------
def _conv3x3_ref(x, w, b):
    y = lax.conv_general_dilated(
        x, w, window_strides=(1, 1), padding="SAME",
        dimension_numbers=("NHWC", "HWIO", "NHWC"))
    return y + b[None, None, None, :]


def tail_forward_ref(x_nhwc, params):
    for (w1, b1, w2, b2) in params["res_blocks"]:
        h = jnp.maximum(_conv3x3_ref(x_nhwc, w1, b1), 0.0)
        x_nhwc = _conv3x3_ref(h, w2, b2) + x_nhwc
    w, b = params["final"]
    return _conv3x3_ref(x_nhwc, w, b)


# ---------------- deterministic parameter init ------------------------------
def init_tail_params(key, in_channel, out_channel, block_num=4):
    params = {"res_blocks": [], "final": None}
    std = (2.0 / (9 * in_channel)) ** 0.5
    for _ in range(block_num):
        key, k1, k2 = jax.random.split(key, 3)
        w1 = std * jax.random.normal(k1, (3, 3, in_channel, in_channel), jnp.float32)
        b1 = jnp.zeros((in_channel,), jnp.float32)
        w2 = std * jax.random.normal(k2, (3, 3, in_channel, in_channel), jnp.float32)
        b2 = jnp.zeros((in_channel,), jnp.float32)
        params["res_blocks"].append((w1, b1, w2, b2))
    key, kf = jax.random.split(key)
    wf = std * jax.random.normal(kf, (3, 3, in_channel, out_channel), jnp.float32)
    bf = jnp.zeros((out_channel,), jnp.float32)
    params["final"] = (wf, bf)
    return params


if __name__ == "__main__":
    in_channel, out_channel, block_num = 8, 4, 4
    N, H, W = 2, 16, 16                       # W*Cin = 128 -> full lane width

    key = jax.random.PRNGKey(0)
    key, kx = jax.random.split(key)
    # PyTorch-convention NCHW input, transposed to NHWC for the TPU kernel.
    x_nchw = jax.random.normal(kx, (N, in_channel, H, W), jnp.float32)
    x_nhwc = jnp.transpose(x_nchw, (0, 2, 3, 1))

    params = init_tail_params(key, in_channel, out_channel, block_num)

    ref_nhwc = jax.block_until_ready(tail_forward_ref(x_nhwc, params))

    # f32 MXU path: tight check against the f32 reference.
    out_nhwc = jax.block_until_ready(tail_forward_pallas(x_nhwc, params))
    np.testing.assert_allclose(np.asarray(out_nhwc), np.asarray(ref_nhwc),
                               rtol=1e-4, atol=1e-4)

    # bf16 MXU-operand path (f32 accumulate): scaled tolerance check.
    out_bf16 = jax.block_until_ready(
        tail_forward_pallas(x_nhwc, params, mxu_dtype=jnp.bfloat16))
    ref_np = np.asarray(ref_nhwc)
    rel_err = (np.linalg.norm(np.asarray(out_bf16) - ref_np)
               / np.linalg.norm(ref_np))
    assert rel_err < 5e-2, f"bf16 path relative error too large: {rel_err}"

    out_nchw = jnp.transpose(out_nhwc, (0, 3, 1, 2))   # back to PyTorch layout
    assert out_nchw.shape == (N, out_channel, H, W)

    print("KERNEL_OK")
</pallas_src>

<mosaic_0001>
module attributes {stable_mosaic.version = 11 : i64} {
  func.func @_tail_kernel(%arg0: i32, %arg1: memref<1x16x128xf32, #tpu.memory_space<vmem>>, %arg2: memref<4x2x3x128x128xf32, #tpu.memory_space<vmem>>, %arg3: memref<4x2x1x128xf32, #tpu.memory_space<vmem>>, %arg4: memref<3x128x64xf32, #tpu.memory_space<vmem>>, %arg5: memref<1x64xf32, #tpu.memory_space<vmem>>, %arg6: memref<1x16x64xf32, #tpu.memory_space<vmem>>, %arg7: memref<1x18x128xf32, #tpu.memory_space<vmem>>) attributes {dimension_semantics = [#tpu.dimension_semantics<parallel>], iteration_bounds = array<i64: 2>, scalar_prefetch = 0 : i64, scratch_operands = 1 : i64, tpu.core_type = #tpu.core_type<tc>, window_params = [{transform_indices = @transform_0, window_bounds = array<i64: 1, 16, 128>}, {pipeline_mode = #tpu.pipeline_mode<synchronous>, transform_indices = @transform_1, window_bounds = array<i64: 4, 2, 3, 128, 128>}, {pipeline_mode = #tpu.pipeline_mode<synchronous>, transform_indices = @transform_2, window_bounds = array<i64: 4, 2, 1, 128>}, {pipeline_mode = #tpu.pipeline_mode<synchronous>, transform_indices = @transform_3, window_bounds = array<i64: 3, 128, 64>}, {pipeline_mode = #tpu.pipeline_mode<synchronous>, transform_indices = @transform_4, window_bounds = array<i64: 1, 64>}, {transform_indices = @transform_5, window_bounds = array<i64: 1, 16, 64>}]} {
    %cst = arith.constant 0.000000e+00 : f32
    %0 = vector.broadcast %cst : f32 to vector<1x1x128xf32>
    %c0 = arith.constant 0 : index
    %c0_0 = arith.constant 0 : index
    %c0_1 = arith.constant 0 : index
    %1 = vector.load %arg7[%c0, %c0_0, %c0_1] : memref<1x18x128xf32, #tpu.memory_space<vmem>>, vector<1x1x128xf32>
    tpu.vector_store %arg7[%c0, %c0_0, %c0_1], %0 {strides = array<i32>} : memref<1x18x128xf32, #tpu.memory_space<vmem>>, vector<1x1x128xf32>,
    %cst_2 = arith.constant 0.000000e+00 : f32
    %2 = vector.broadcast %cst_2 : f32 to vector<1x1x128xf32>
    %c0_3 = arith.constant 0 : index
    %c17 = arith.constant 17 : index
    %c0_4 = arith.constant 0 : index
    %3 = vector.load %arg7[%c0_3, %c17, %c0_4] : memref<1x18x128xf32, #tpu.memory_space<vmem>>, vector<1x1x128xf32>
    tpu.vector_store %arg7[%c0_3, %c17, %c0_4], %2 {strides = array<i32>} : memref<1x18x128xf32, #tpu.memory_space<vmem>>, vector<1x1x128xf32>,
    %c0_5 = arith.constant 0 : index
    %c0_6 = arith.constant 0 : index
    %c0_7 = arith.constant 0 : index
    %4 = vector.load %arg1[%c0_5, %c0_6, %c0_7] : memref<1x16x128xf32, #tpu.memory_space<vmem>>, vector<1x16x128xf32>
    %c0_8 = arith.constant 0 : index
    %c1 = arith.constant 1 : index
    %c0_9 = arith.constant 0 : index
    %5 = vector.load %arg7[%c0_8, %c1, %c0_9] : memref<1x18x128xf32, #tpu.memory_space<vmem>>, vector<1x16x128xf32>
    tpu.vector_store %arg7[%c0_8, %c1, %c0_9], %4 {strides = array<i32>} : memref<1x18x128xf32, #tpu.memory_space<vmem>>, vector<1x16x128xf32>,
    %c0_i32 = arith.constant 0 : i32
    %c4_i32 = arith.constant 4 : i32
    %6 = arith.addi %c0_i32, %c4_i32 : i32
    %c1_i32 = arith.constant 1 : i32
    scf.for %arg8 = %c0_i32 to %6 step %c1_i32  : i32 {
      %c0_37 = arith.constant 0 : index
      %c1_38 = arith.constant 1 : index
      %c0_39 = arith.constant 0 : index
      %31 = vector.load %arg7[%c0_37, %c1_38, %c0_39] : memref<1x18x128xf32, #tpu.memory_space<vmem>>, vector<1x16x128xf32>
      %32 = vector.shape_cast %31 : vector<1x16x128xf32> to vector<16x128xf32>
      %33 = arith.index_cast %arg8 : i32 to index
      %c0_40 = arith.constant 0 : index
      %c0_41 = arith.constant 0 : index
      %c0_42 = arith.constant 0 : index
      %34 = vector.load %arg3[%33, %c0_40, %c0_41, %c0_42] : memref<4x2x1x128xf32, #tpu.memory_space<vmem>>, vector<1x1x1x128xf32>
      %35 = vector.shape_cast %34 : vector<1x1x1x128xf32> to vector<1x128xf32>
      %cst_43 = arith.constant 0.000000e+00 : f32
      %36 = vector.broadcast %cst_43 : f32 to vector<16x128xf32>
      %c0_44 = arith.constant 0 : index
      %c0_45 = arith.constant 0 : index
      %c0_46 = arith.constant 0 : index
      %37 = vector.load %arg7[%c0_44, %c0_45, %c0_46] : memref<1x18x128xf32, #tpu.memory_space<vmem>>, vector<1x16x128xf32>
      %38 = vector.shape_cast %37 : vector<1x16x128xf32> to vector<16x128xf32>
      %39 = arith.index_cast %arg8 : i32 to index
      %c0_47 = arith.constant 0 : index
      %c0_48 = arith.constant 0 : index
      %c0_49 = arith.constant 0 : index
      %c0_50 = arith.constant 0 : index
      %40 = vector.load %arg2[%39, %c0_47, %c0_48, %c0_49, %c0_50] : memref<4x2x3x128x128xf32, #tpu.memory_space<vmem>>, vector<1x1x1x128x128xf32>
      %41 = vector.shape_cast %40 : vector<1x1x1x128x128xf32> to vector<128x128xf32>
      %cst_51 = arith.constant dense<0.000000e+00> : vector<16x128xf32>
      %42 = tpu.matmul %38, %41, %cst_51 {dimension_numbers = #tpu.dot_dimension_numbers<[1], [0], [0], [1], [0, 0, 1, 1], [], []>} : vector<16x128xf32>, vector<128x128xf32>, vector<16x128xf32> -> vector<16x128xf32>
      %43 = arith.addf %36, %42 : vector<16x128xf32>
      %c0_52 = arith.constant 0 : index
      %c1_53 = arith.constant 1 : index
      %c0_54 = arith.constant 0 : index
      %44 = vector.load %arg7[%c0_52, %c1_53, %c0_54] : memref<1x18x128xf32, #tpu.memory_space<vmem>>, vector<1x16x128xf32>
      %45 = vector.shape_cast %44 : vector<1x16x128xf32> to vector<16x128xf32>
      %46 = arith.index_cast %arg8 : i32 to index
      %c0_55 = arith.constant 0 : index
      %c1_56 = arith.constant 1 : index
      %c0_57 = arith.constant 0 : index
      %c0_58 = arith.constant 0 : index
      %47 = vector.load %arg2[%46, %c0_55, %c1_56, %c0_57, %c0_58] : memref<4x2x3x128x128xf32, #tpu.memory_space<vmem>>, vector<1x1x1x128x128xf32>
      %48 = vector.shape_cast %47 : vector<1x1x1x128x128xf32> to vector<128x128xf32>
      %cst_59 = arith.constant dense<0.000000e+00> : vector<16x128xf32>
      %49 = tpu.matmul %45, %48, %cst_59 {dimension_numbers = #tpu.dot_dimension_numbers<[1], [0], [0], [1], [0, 0, 1, 1], [], []>} : vector<16x128xf32>, vector<128x128xf32>, vector<16x128xf32> -> vector<16x128xf32>
      %50 = arith.addf %43, %49 : vector<16x128xf32>
      %c0_60 = arith.constant 0 : index
      %c2_61 = arith.constant 2 : index
      %c0_62 = arith.constant 0 : index
      %51 = vector.load %arg7[%c0_60, %c2_61, %c0_62] : memref<1x18x128xf32, #tpu.memory_space<vmem>>, vector<1x16x128xf32>
      %52 = vector.shape_cast %51 : vector<1x16x128xf32> to vector<16x128xf32>
      %53 = arith.index_cast %arg8 : i32 to index
      %c0_63 = arith.constant 0 : index
      %c2_64 = arith.constant 2 : index
      %c0_65 = arith.constant 0 : index
      %c0_66 = arith.constant 0 : index
      %54 = vector.load %arg2[%53, %c0_63, %c2_64, %c0_65, %c0_66] : memref<4x2x3x128x128xf32, #tpu.memory_space<vmem>>, vector<1x1x1x128x128xf32>
      %55 = vector.shape_cast %54 : vector<1x1x1x128x128xf32> to vector<128x128xf32>
      %cst_67 = arith.constant dense<0.000000e+00> : vector<16x128xf32>
      %56 = tpu.matmul %52, %55, %cst_67 {dimension_numbers = #tpu.dot_dimension_numbers<[1], [0], [0], [1], [0, 0, 1, 1], [], []>} : vector<16x128xf32>, vector<128x128xf32>, vector<16x128xf32> -> vector<16x128xf32>
      %57 = arith.addf %50, %56 : vector<16x128xf32>
      %58 = vector.broadcast %35 : vector<1x128xf32> to vector<16x128xf32>
      %59 = arith.addf %57, %58 : vector<16x128xf32>
      %cst_68 = arith.constant 0.000000e+00 : f32
      %60 = vector.broadcast %cst_68 : f32 to vector<16x128xf32>
      %61 = arith.maximumf %59, %60 : vector<16x128xf32>
      %62 = vector.shape_cast %61 : vector<16x128xf32> to vector<1x16x128xf32>
      %c0_69 = arith.constant 0 : index
      %c1_70 = arith.constant 1 : index
      %c0_71 = arith.constant 0 : index
      %63 = vector.load %arg7[%c0_69, %c1_70, %c0_71] : memref<1x18x128xf32, #tpu.memory_space<vmem>>, vector<1x16x128xf32>
      tpu.vector_store %arg7[%c0_69, %c1_70, %c0_71], %62 {strides = array<i32>} : memref<1x18x128xf32, #tpu.memory_space<vmem>>, vector<1x16x128xf32>,
      %64 = arith.index_cast %arg8 : i32 to index
      %c1_72 = arith.constant 1 : index
      %c0_73 = arith.constant 0 : index
      %c0_74 = arith.constant 0 : index
      %65 = vector.load %arg3[%64, %c1_72, %c0_73, %c0_74] : memref<4x2x1x128xf32, #tpu.memory_space<vmem>>, vector<1x1x1x128xf32>
      %66 = vector.shape_cast %65 : vector<1x1x1x128xf32> to vector<1x128xf32>
      %cst_75 = arith.constant 0.000000e+00 : f32
      %67 = vector.broadcast %cst_75 : f32 to vector<16x128xf32>
      %c0_76 = arith.constant 0 : index
      %c0_77 = arith.constant 0 : index
      %c0_78 = arith.constant 0 : index
      %68 = vector.load %arg7[%c0_76, %c0_77, %c0_78] : memref<1x18x128xf32, #tpu.memory_space<vmem>>, vector<1x16x128xf32>
      %69 = vector.shape_cast %68 : vector<1x16x128xf32> to vector<16x128xf32>
      %70 = arith.index_cast %arg8 : i32 to index
      %c1_79 = arith.constant 1 : index
      %c0_80 = arith.constant 0 : index
      %c0_81 = arith.constant 0 : index
      %c0_82 = arith.constant 0 : index
      %71 = vector.load %arg2[%70, %c1_79, %c0_80, %c0_81, %c0_82] : memref<4x2x3x128x128xf32, #tpu.memory_space<vmem>>, vector<1x1x1x128x128xf32>
      %72 = vector.shape_cast %71 : vector<1x1x1x128x128xf32> to vector<128x128xf32>
      %cst_83 = arith.constant dense<0.000000e+00> : vector<16x128xf32>
      %73 = tpu.matmul %69, %72, %cst_83 {dimension_numbers = #tpu.dot_dimension_numbers<[1], [0], [0], [1], [0, 0, 1, 1], [], []>} : vector<16x128xf32>, vector<128x128xf32>, vector<16x128xf32> -> vector<16x128xf32>
      %74 = arith.addf %67, %73 : vector<16x128xf32>
      %c0_84 = arith.constant 0 : index
      %c1_85 = arith.constant 1 : index
      %c0_86 = arith.constant 0 : index
      %75 = vector.load %arg7[%c0_84, %c1_85, %c0_86] : memref<1x18x128xf32, #tpu.memory_space<vmem>>, vector<1x16x128xf32>
      %76 = vector.shape_cast %75 : vector<1x16x128xf32> to vector<16x128xf32>
      %77 = arith.index_cast %arg8 : i32 to index
      %c1_87 = arith.constant 1 : index
      %c1_88 = arith.constant 1 : index
      %c0_89 = arith.constant 0 : index
      %c0_90 = arith.constant 0 : index
      %78 = vector.load %arg2[%77, %c1_87, %c1_88, %c0_89, %c0_90] : memref<4x2x3x128x128xf32, #tpu.memory_space<vmem>>, vector<1x1x1x128x128xf32>
      %79 = vector.shape_cast %78 : vector<1x1x1x128x128xf32> to vector<128x128xf32>
      %cst_91 = arith.constant dense<0.000000e+00> : vector<16x128xf32>
      %80 = tpu.matmul %76, %79, %cst_91 {dimension_numbers = #tpu.dot_dimension_numbers<[1], [0], [0], [1], [0, 0, 1, 1], [], []>} : vector<16x128xf32>, vector<128x128xf32>, vector<16x128xf32> -> vector<16x128xf32>
      %81 = arith.addf %74, %80 : vector<16x128xf32>
      %c0_92 = arith.constant 0 : index
      %c2_93 = arith.constant 2 : index
      %c0_94 = arith.constant 0 : index
      %82 = vector.load %arg7[%c0_92, %c2_93, %c0_94] : memref<1x18x128xf32, #tpu.memory_space<vmem>>, vector<1x16x128xf32>
      %83 = vector.shape_cast %82 : vector<1x16x128xf32> to vector<16x128xf32>
      %84 = arith.index_cast %arg8 : i32 to index
      %c1_95 = arith.constant 1 : index
      %c2_96 = arith.constant 2 : index
      %c0_97 = arith.constant 0 : index
      %c0_98 = arith.constant 0 : index
      %85 = vector.load %arg2[%84, %c1_95, %c2_96, %c0_97, %c0_98] : memref<4x2x3x128x128xf32, #tpu.memory_space<vmem>>, vector<1x1x1x128x128xf32>
      %86 = vector.shape_cast %85 : vector<1x1x1x128x128xf32> to vector<128x128xf32>
      %cst_99 = arith.constant dense<0.000000e+00> : vector<16x128xf32>
      %87 = tpu.matmul %83, %86, %cst_99 {dimension_numbers = #tpu.dot_dimension_numbers<[1], [0], [0], [1], [0, 0, 1, 1], [], []>} : vector<16x128xf32>, vector<128x128xf32>, vector<16x128xf32> -> vector<16x128xf32>
      %88 = arith.addf %81, %87 : vector<16x128xf32>
      %89 = vector.broadcast %66 : vector<1x128xf32> to vector<16x128xf32>
      %90 = arith.addf %88, %89 : vector<16x128xf32>
      %91 = arith.addf %90, %32 : vector<16x128xf32>
      %92 = vector.shape_cast %91 : vector<16x128xf32> to vector<1x16x128xf32>
      %c0_100 = arith.constant 0 : index
      %c1_101 = arith.constant 1 : index
      %c0_102 = arith.constant 0 : index
      %93 = vector.load %arg7[%c0_100, %c1_101, %c0_102] : memref<1x18x128xf32, #tpu.memory_space<vmem>>, vector<1x16x128xf32>
      tpu.vector_store %arg7[%c0_100, %c1_101, %c0_102], %92 {strides = array<i32>} : memref<1x18x128xf32, #tpu.memory_space<vmem>>, vector<1x16x128xf32>,
    }
    %c4_i32_10 = arith.constant 4 : i32
    %c0_11 = arith.constant 0 : index
    %c0_12 = arith.constant 0 : index
    %7 = vector.load %arg5[%c0_11, %c0_12] : memref<1x64xf32, #tpu.memory_space<vmem>>, vector<1x64xf32>
    %cst_13 = arith.constant 0.000000e+00 : f32
    %8 = vector.broadcast %cst_13 : f32 to vector<16x64xf32>
    %c0_14 = arith.constant 0 : index
    %c0_15 = arith.constant 0 : index
    %c0_16 = arith.constant 0 : index
    %9 = vector.load %arg7[%c0_14, %c0_15, %c0_16] : memref<1x18x128xf32, #tpu.memory_space<vmem>>, vector<1x16x128xf32>
    %10 = vector.shape_cast %9 : vector<1x16x128xf32> to vector<16x128xf32>
    %c0_17 = arith.constant 0 : index
    %c0_18 = arith.constant 0 : index
    %c0_19 = arith.constant 0 : index
    %11 = vector.load %arg4[%c0_17, %c0_18, %c0_19] : memref<3x128x64xf32, #tpu.memory_space<vmem>>, vector<1x128x64xf32>
    %12 = vector.shape_cast %11 : vector<1x128x64xf32> to vector<128x64xf32>
    %cst_20 = arith.constant dense<0.000000e+00> : vector<16x64xf32>
    %13 = tpu.matmul %10, %12, %cst_20 {dimension_numbers = #tpu.dot_dimension_numbers<[1], [0], [0], [1], [0, 0, 1, 1], [], []>} : vector<16x128xf32>, vector<128x64xf32>, vector<16x64xf32> -> vector<16x64xf32>
    %14 = arith.addf %8, %13 : vector<16x64xf32>
    %c0_21 = arith.constant 0 : index
    %c1_22 = arith.constant 1 : index
    %c0_23 = arith.constant 0 : index
    %15 = vector.load %arg7[%c0_21, %c1_22, %c0_23] : memref<1x18x128xf32, #tpu.memory_space<vmem>>, vector<1x16x128xf32>
    %16 = vector.shape_cast %15 : vector<1x16x128xf32> to vector<16x128xf32>
    %c1_24 = arith.constant 1 : index
    %c0_25 = arith.constant 0 : index
    %c0_26 = arith.constant 0 : index
    %17 = vector.load %arg4[%c1_24, %c0_25, %c0_26] : memref<3x128x64xf32, #tpu.memory_space<vmem>>, vector<1x128x64xf32>
    %18 = vector.shape_cast %17 : vector<1x128x64xf32> to vector<128x64xf32>
    %cst_27 = arith.constant dense<0.000000e+00> : vector<16x64xf32>
    %19 = tpu.matmul %16, %18, %cst_27 {dimension_numbers = #tpu.dot_dimension_numbers<[1], [0], [0], [1], [0, 0, 1, 1], [], []>} : vector<16x128xf32>, vector<128x64xf32>, vector<16x64xf32> -> vector<16x64xf32>
    %20 = arith.addf %14, %19 : vector<16x64xf32>
    %c0_28 = arith.constant 0 : index
    %c2 = arith.constant 2 : index
    %c0_29 = arith.constant 0 : index
    %21 = vector.load %arg7[%c0_28, %c2, %c0_29] : memref<1x18x128xf32, #tpu.memory_space<vmem>>, vector<1x16x128xf32>
    %22 = vector.shape_cast %21 : vector<1x16x128xf32> to vector<16x128xf32>
    %c2_30 = arith.constant 2 : index
    %c0_31 = arith.constant 0 : index
    %c0_32 = arith.constant 0 : index
    %23 = vector.load %arg4[%c2_30, %c0_31, %c0_32] : memref<3x128x64xf32, #tpu.memory_space<vmem>>, vector<1x128x64xf32>
    %24 = vector.shape_cast %23 : vector<1x128x64xf32> to vector<128x64xf32>
    %cst_33 = arith.constant dense<0.000000e+00> : vector<16x64xf32>
    %25 = tpu.matmul %22, %24, %cst_33 {dimension_numbers = #tpu.dot_dimension_numbers<[1], [0], [0], [1], [0, 0, 1, 1], [], []>} : vector<16x128xf32>, vector<128x64xf32>, vector<16x64xf32> -> vector<16x64xf32>
    %26 = arith.addf %20, %25 : vector<16x64xf32>
    %27 = vector.broadcast %7 : vector<1x64xf32> to vector<16x64xf32>
    %28 = arith.addf %26, %27 : vector<16x64xf32>
    %29 = vector.shape_cast %28 : vector<16x64xf32> to vector<1x16x64xf32>
    %c0_34 = arith.constant 0 : index
    %c0_35 = arith.constant 0 : index
    %c0_36 = arith.constant 0 : index
    %30 = vector.load %arg6[%c0_34, %c0_35, %c0_36] : memref<1x16x64xf32, #tpu.memory_space<vmem>>, vector<1x16x64xf32>
    tpu.vector_store %arg6[%c0_34, %c0_35, %c0_36], %29 {strides = array<i32>} : memref<1x16x64xf32, #tpu.memory_space<vmem>>, vector<1x16x64xf32>,
    return
  }
  func.func @transform_0(%arg0: i32) -> (i32, i32, i32) {
    %c0_i32 = arith.constant 0 : i32
    %c0_i32_0 = arith.constant 0 : i32
    %c0_i32_1 = arith.constant 0 : i32
    return %arg0, %c0_i32, %c0_i32_0 : i32, i32, i32
  }
  func.func @transform_1(%arg0: i32) -> (i32, i32, i32, i32, i32) {
    %c0_i32 = arith.constant 0 : i32
    %c0_i32_0 = arith.constant 0 : i32
    %c0_i32_1 = arith.constant 0 : i32
    %c0_i32_2 = arith.constant 0 : i32
    %c0_i32_3 = arith.constant 0 : i32
    %c0_i32_4 = arith.constant 0 : i32
    return %c0_i32, %c0_i32_0, %c0_i32_1, %c0_i32_2, %c0_i32_3 : i32, i32, i32, i32, i32
  }
  func.func @transform_2(%arg0: i32) -> (i32, i32, i32, i32) {
    %c0_i32 = arith.constant 0 : i32
    %c0_i32_0 = arith.constant 0 : i32
    %c0_i32_1 = arith.constant 0 : i32
    %c0_i32_2 = arith.constant 0 : i32
    %c0_i32_3 = arith.constant 0 : i32
    return %c0_i32, %c0_i32_0, %c0_i32_1, %c0_i32_2 : i32, i32, i32, i32
  }
  func.func @transform_3(%arg0: i32) -> (i32, i32, i32) {
    %c0_i32 = arith.constant 0 : i32
    %c0_i32_0 = arith.constant 0 : i32
    %c0_i32_1 = arith.constant 0 : i32
    %c0_i32_2 = arith.constant 0 : i32
    return %c0_i32, %c0_i32_0, %c0_i32_1 : i32, i32, i32
  }
  func.func @transform_4(%arg0: i32) -> (i32, i32) {
    %c0_i32 = arith.constant 0 : i32
    %c0_i32_0 = arith.constant 0 : i32
    %c0_i32_1 = arith.constant 0 : i32
    return %c0_i32, %c0_i32_0 : i32, i32
  }
  func.func @transform_5(%arg0: i32) -> (i32, i32, i32) {
    %c0_i32 = arith.constant 0 : i32
    %c0_i32_0 = arith.constant 0 : i32
    %c0_i32_1 = arith.constant 0 : i32
    return %arg0, %c0_i32, %c0_i32_0 : i32, i32, i32
  }
}

</mosaic_0001>

<llo_original>
// kernel: tpu_custom_call.1
$region0: #{tpu_custom_call.1}
  #allocation0 [shape = 'u32[]', space=smem, size = 0x4, offset = 0x4, fixed_abs, tag = 'smem constant byte address 0x4 - core index']
  #allocation1 [shape = 'u32[144,128]{1,0:T(1,128)}', space=vmem, size = 0x12000, scoped, tag = 'internal scratch']
  #allocation2 [shape = 'f32[1,18,128]{2,1,0:T(8,128)}', space=vmem, size = 0x3000, scoped, tag = 'scratch operand']
  %s0 = inlined_call_operand.hbm [shape: f32[2,16,128], index: 0, kind: input, shape index: {}]
  %s1 = inlined_call_operand.hbm [shape: f32[4,2,3,128,128], index: 1, kind: input, shape index: {}]
  %s2 = inlined_call_operand.hbm [shape: f32[4,2,1,128], index: 2, kind: input, shape index: {}]
  %s3 = inlined_call_operand.vmem [shape: f32[3,128,64], index: 3, kind: input, shape index: {}]
  %s4 = inlined_call_operand.hbm [shape: f32[1,64], index: 4, kind: input, shape index: {}]
  %s5 = inlined_call_operand.hbm [shape: f32[2,16,64], index: 5, kind: output, shape index: {}]
  %s6 = sld [smem:[#allocation0]]
  $region76: #{tpu_custom_call.1} parent=0
    _
  %s8 = ssub.s32 1, %s6
  %s9 = scalar_select 0, %s8, %s6
  $region1: #{tpu_custom_call.1} parent=0
    #allocation3 [shape = 'u8[16384]{0}', space=vmem, size = 0x4000, scoped, tag = 'input window, operand 0']
    #allocation4 [shape = 's32[2]{0}', space=sflag, size = 0x8, scoped, tag = 'scoped memory for tpu_custom_call.1']
    #allocation5 [shape = 's32[2]{0}', space=sflag, size = 0x8, scoped, tag = 'scoped memory for tpu_custom_call.1']
    #allocation6 [shape = 'u8[1572864]{0}', space=vmem, size = 0x180000, scoped, tag = 'input window, operand 1, single buffered']
    #allocation7 [shape = 's32[1]{0}', space=sflag, size = 0x4, scoped, tag = 'scoped memory for tpu_custom_call.1']
    #allocation8 [shape = 'u8[4096]{0}', space=vmem, size = 0x1000, scoped, tag = 'input window, operand 2, single buffered']
    #allocation9 [shape = 'u8[512]{0}', space=vmem, size = 0x400, scoped, tag = 'input window, operand 4, single buffered']
    #allocation10 [shape = 's32[1]{0}', space=sflag, size = 0x4, scoped, tag = 'scoped memory for tpu_custom_call.1']
    #allocation11 [shape = 'u8[16384]{0}', space=vmem, size = 0x4000, scoped, tag = 'output window, operand 0']
    %10 = vsyncpa [#allocation4], 0
    %s11 = scalar_lea.sflag [#allocation4], 1
    %12 = vsyncpa %s11, 0
    %13 = vsyncpa [#allocation7], 0
    %14 = vsyncpa [#allocation10], 0
    %15 = vsyncpa [#allocation5], 0
    %s16 = scalar_lea.sflag [#allocation5], 1
    %17 = vsyncpa %s16, 0
    loop: start=0, step=1, limit=4
    $region2: #{tpu_custom_call.1} parent=1 // loop_pre_header
      _
    $region3: #{tpu_custom_call.1} parent=1 // loop_header
      %s19 = sphi 0, %s23
      %p20 = scmp.ge.s32.totalorder %s19, 4
      %s29 = sphi 0, %s31
      %s32 = sphi 0, %s29
      %s33 = sphi 0, %s32
      %s49 = sphi 0, %s33
      %s53 = sphi 0, %s53
      %s55 = sphi 0, %s53
      %s56 = sphi 0, %s55
      %s70 = sphi 0, %s56
      %s74 = sphi 0, %s74
      %s76 = sphi 0, %s74
      %s77 = sphi 0, %s76
      %s91 = sphi 0, %s77
      %s95 = sphi 0, %s95
      %s97 = sphi 0, %s95
      %s98 = sphi 0, %s97
      %s112 = sphi 0, %s98
      %s116 = sphi 0, %s116
      %s118 = sphi 0, %s116
      %s119 = sphi 0, %s118
      %s133 = sphi 0, %s119
      %s139 = sphi 0, %s141
      %s142 = sphi 0, %s139
      %s143 = sphi 0, %s142
      %s159 = sphi 0, %s143
    $region4: #{tpu_custom_call.1} parent=1 // loop_header_branch
      %22 = sbr.rel (%p20) target = $region8
    $region5: #{tpu_custom_call.1} parent=1 // loop_body
      %s24 = ssub.s32 %s19, 1
      %s25 = ssub.s32 %s19, 2
      %s26 = sadd.s32 %s19, 1
      %s27 = ssub.s32 %s19, %s26
      %p28 = scmp.eq.s32.totalorder %s27, 0
      %s30 = sadd.s32 %s29, 1
      %s31 = scalar_select %p28, %s29, %s30
      %p34 = pneg %p28
      %p35 = scmp.eq.s32.totalorder %s19, 1
      %p36 = por %p34, %p35
      %p37 = scmp.ne.s32.totalorder %s29, %s32
      %p38 = scmp.eq.s32.totalorder %s19, 0
      %p39 = por %p37, %p38
      %p40 = scmp.ne.s32.totalorder %s29, %s32
      %p41 = scmp.eq.s32.totalorder %s24, 1
      %p42 = por %p40, %p41
      %p43 = scmp.ne.s32.totalorder %s32, %s33
      %p44 = scmp.eq.s32.totalorder %s24, 0
      %p45 = por %p43, %p44
      %p46 = scmp.ne.s32.totalorder %s32, %s33
      %p47 = scmp.eq.s32.totalorder %s25, 1
      %p48 = por %p46, %p47
      %p50 = scmp.ne.s32.totalorder %s33, %s49
      %p51 = scmp.eq.s32.totalorder %s25, 0
      %p52 = por %p50, %p51
      %s54 = sadd.s32 %s53, 1
      %p57 = scmp.eq.s32.totalorder %s19, 1
      %p58 = scmp.ne.s32.totalorder %s53, %s55
      %p59 = scmp.eq.s32.totalorder %s19, 0
      %p60 = por %p58, %p59
      %p61 = scmp.ne.s32.totalorder %s53, %s55
      %p62 = scmp.eq.s32.totalorder %s24, 1
      %p63 = por %p61, %p62
      %p64 = scmp.ne.s32.totalorder %s55, %s56
      %p65 = scmp.eq.s32.totalorder %s24, 0
      %p66 = por %p64, %p65
      %p67 = scmp.ne.s32.totalorder %s55, %s56
      %p68 = scmp.eq.s32.totalorder %s25, 1
      %p69 = por %p67, %p68
      %p71 = scmp.ne.s32.totalorder %s56, %s70
      %p72 = scmp.eq.s32.totalorder %s25, 0
      %p73 = por %p71, %p72
      %s75 = sadd.s32 %s74, 1
      %p78 = scmp.eq.s32.totalorder %s19, 1
      %p79 = scmp.ne.s32.totalorder %s74, %s76
      %p80 = scmp.eq.s32.totalorder %s19, 0
      %p81 = por %p79, %p80
      %p82 = scmp.ne.s32.totalorder %s74, %s76
      %p83 = scmp.eq.s32.totalorder %s24, 1
      %p84 = por %p82, %p83
      %p85 = scmp.ne.s32.totalorder %s76, %s77
      %p86 = scmp.eq.s32.totalorder %s24, 0
      %p87 = por %p85, %p86
      %p88 = scmp.ne.s32.totalorder %s76, %s77
      %p89 = scmp.eq.s32.totalorder %s25, 1
      %p90 = por %p88, %p89
      %p92 = scmp.ne.s32.totalorder %s77, %s91
      %p93 = scmp.eq.s32.totalorder %s25, 0
      %p94 = por %p92, %p93
      %s96 = sadd.s32 %s95, 1
      %p99 = scmp.eq.s32.totalorder %s19, 1
      %p100 = scmp.ne.s32.totalorder %s95, %s97
      %p101 = scmp.eq.s32.totalorder %s19, 0
      %p102 = por %p100, %p101
      %p103 = scmp.ne.s32.totalorder %s95, %s97
      %p104 = scmp.eq.s32.totalorder %s24, 1
      %p105 = por %p103, %p104
      %p106 = scmp.ne.s32.totalorder %s97, %s98
      %p107 = scmp.eq.s32.totalorder %s24, 0
      %p108 = por %p106, %p107
      %p109 = scmp.ne.s32.totalorder %s97, %s98
      %p110 = scmp.eq.s32.totalorder %s25, 1
      %p111 = por %p109, %p110
      %p113 = scmp.ne.s32.totalorder %s98, %s112
      %p114 = scmp.eq.s32.totalorder %s25, 0
      %p115 = por %p113, %p114
      %s117 = sadd.s32 %s116, 1
      %p120 = scmp.eq.s32.totalorder %s19, 1
      %p121 = scmp.ne.s32.totalorder %s116, %s118
      %p122 = scmp.eq.s32.totalorder %s19, 0
      %p123 = por %p121, %p122
      %p124 = scmp.ne.s32.totalorder %s116, %s118
      %p125 = scmp.eq.s32.totalorder %s24, 1
      %p126 = por %p124, %p125
      %p127 = scmp.ne.s32.totalorder %s118, %s119
      %p128 = scmp.eq.s32.totalorder %s24, 0
      %p129 = por %p127, %p128
      %p130 = scmp.ne.s32.totalorder %s118, %s119
      %p131 = scmp.eq.s32.totalorder %s25, 1
      %p132 = por %p130, %p131
      %p134 = scmp.ne.s32.totalorder %s119, %s133
      %p135 = scmp.eq.s32.totalorder %s25, 0
      %p136 = por %p134, %p135
      %s137 = ssub.s32 %s19, %s26
      %p138 = scmp.eq.s32.totalorder %s137, 0
      %s140 = sadd.s32 %s139, 1
      %s141 = scalar_select %p138, %s139, %s140
      %p144 = pneg %p138
      %p145 = scmp.eq.s32.totalorder %s19, 1
      %p146 = por %p144, %p145
      %p147 = scmp.ne.s32.totalorder %s139, %s142
      %p148 = scmp.eq.s32.totalorder %s19, 0
      %p149 = por %p147, %p148
      %p150 = scmp.ne.s32.totalorder %s139, %s142
      %p151 = scmp.eq.s32.totalorder %s24, 1
      %p152 = por %p150, %p151
      %p153 = scmp.ne.s32.totalorder %s142, %s143
      %p154 = scmp.eq.s32.totalorder %s24, 0
      %p155 = por %p153, %p154
      %p156 = scmp.ne.s32.totalorder %s142, %s143
      %p157 = scmp.eq.s32.totalorder %s25, 1
      %p158 = por %p156, %p157
      %p160 = scmp.ne.s32.totalorder %s143, %s159
      %p161 = scmp.eq.s32.totalorder %s25, 0
      %p162 = por %p160, %p161
      %p163 = scmp.le.s32.totalorder 1, %s19
      %p164 = scmp.lt.s32.totalorder %s19, 3
      %p165 = pnand %p163, %p164
      %p166 = pneg %p165
      // Predicated region
      $region9: #{tpu_custom_call.1} parent=5 // pred_check
        _
      $region10: #{tpu_custom_call.1} parent=5 // pred_check_branch
        %168 = sbr.rel (%p165) target = $region12
      $region11: #{tpu_custom_call.1} parent=5 // pred_region
        %s169 = ssub.s32 %s19, 1
        // Predicated region
        $region13: #{tpu_custom_call.1} parent=11 // pred_check
          %p170 = pneg %p66
        $region14: #{tpu_custom_call.1} parent=11 // pred_check_branch
          %172 = sbr.rel (%p170) target = $region16
        $region15: #{tpu_custom_call.1} parent=11 // pred_region
          %s174 = ssub.s32 49152, 49152
          %175 = vsyncadd [#allocation7], %s174
          %s176 = sshll.u32 [#allocation6], 4
          %s177 = int_to_ptr.vmem [resolvable:$true] %s176
          %182 = dma.hbm_to_vmem [thread:$0]  %s1, 49152, %s177, [#allocation7], 128, 128, 8
        $region16: #{tpu_custom_call.1} parent=11 // pred_fallthru
          _
        // Predicated region
        $region17: #{tpu_custom_call.1} parent=11 // pred_check
          %p183 = pneg %p87
        $region18: #{tpu_custom_call.1} parent=11 // pred_check_branch
          %185 = sbr.rel (%p183) target = $region20
        $region19: #{tpu_custom_call.1} parent=11 // pred_region
          %s187 = ssub.s32 128, 128
          %188 = vsyncadd [#allocation7], %s187
          %s189 = sshll.u32 [#allocation8], 4
          %s190 = int_to_ptr.vmem [resolvable:$true] %s189
          %195 = dma.hbm_to_vmem [thread:$0]  %s2, 128, %s190, [#allocation7], 16, 16, 1
        $region20: #{tpu_custom_call.1} parent=11 // pred_fallthru
          _
        // Predicated region
        $region21: #{tpu_custom_call.1} parent=11 // pred_check
          %p196 = pneg %p108
        $region22: #{tpu_custom_call.1} parent=11 // pred_check_branch
          %198 = sbr.rel (%p196) target = $region24
        $region23: #{tpu_custom_call.1} parent=11 // pred_region
          _
        $region24: #{tpu_custom_call.1} parent=11 // pred_fallthru
          _
        // Predicated region
        $region25: #{tpu_custom_call.1} parent=11 // pred_check
          %p199 = pneg %p129
        $region26: #{tpu_custom_call.1} parent=11 // pred_check_branch
          %201 = sbr.rel (%p199) target = $region28
        $region27: #{tpu_custom_call.1} parent=11 // pred_region
          %s203 = ssub.s32 16, 16
          %204 = vsyncadd [#allocation10], %s203
          %s206 = sshll.u32 [#allocation9], 4
          %s207 = int_to_ptr.vmem [resolvable:$true] %s206
          %209 = dma.hbm_to_vmem [thread:$0]  %s4, 16, %s207, [#allocation10]
        $region28: #{tpu_custom_call.1} parent=11 // pred_fallthru
          _
      $region12: #{tpu_custom_call.1} parent=5 // pred_fallthru
        _
      %p210 = scmp.lt.s32.totalorder %s19, 2
      // Predicated region
      $region29: #{tpu_custom_call.1} parent=5 // pred_check
        %p211 = pneg %p210
      $region30: #{tpu_custom_call.1} parent=5 // pred_check_branch
        %213 = sbr.rel (%p211) target = $region32
      $region31: #{tpu_custom_call.1} parent=5 // pred_region
        // Predicated region
        $region33: #{tpu_custom_call.1} parent=31 // pred_check
          %p214 = pneg %p39
        $region34: #{tpu_custom_call.1} parent=31 // pred_check_branch
          %216 = sbr.rel (%p214) target = $region36
        $region35: #{tpu_custom_call.1} parent=31 // pred_region
          %s217 = sand.u32 %s29, 1
          %s218 = scalar_lea.sflag [#allocation4], %s217
          %s219 = sand.u32 %s29, 1
          %s220 = smul.addr %s219, 16
          %s221 = scalar_lea.vmem [#allocation3], %s220
          %s223 = ssub.s32 256, 256
          %224 = vsyncadd %s218, %s223
          %s225 = smul.addr %s19, 2
          %s226 = smul.addr %s225, 128
          %s227 = scalar_lea.hbm %s0, %s226
          %s228 = sshll.u32 %s221, 4
          %s229 = int_to_ptr.vmem [resolvable:$true] %s228
          %234 = dma.hbm_to_vmem [thread:$0]  %s227, 256, %s229, %s218, 128, 128, 8
        $region36: #{tpu_custom_call.1} parent=31 // pred_fallthru
          _
      $region32: #{tpu_custom_call.1} parent=5 // pred_fallthru
        _
      %p235 = scmp.le.s32.totalorder 1, %s19
      %p236 = scmp.lt.s32.totalorder %s19, 3
      %p237 = pnand %p235, %p236
      %p238 = pneg %p237
      // Predicated region
      $region37: #{tpu_custom_call.1} parent=5 // pred_check
        _
      $region38: #{tpu_custom_call.1} parent=5 // pred_check_branch
        %240 = sbr.rel (%p237) target = $region40
      $region39: #{tpu_custom_call.1} parent=5 // pred_region
        %s241 = ssub.s32 %s19, 1
        %s242 = sand.u32 %s32, 1
        %s243 = scalar_lea.sflag [#allocation4], %s242
        %s244 = sand.u32 %s32, 1
        %s245 = smul.addr %s244, 16
        %s246 = scalar_lea.vmem [#allocation3], %s245
        // Predicated region
        $region41: #{tpu_custom_call.1} parent=39 // pred_check
          %p247 = pneg %p45
        $region42: #{tpu_custom_call.1} parent=39 // pred_check_branch
          %249 = sbr.rel (%p247) target = $region44
        $region43: #{tpu_custom_call.1} parent=39 // pred_region
          %250 = dma.done %s243, 256
        $region44: #{tpu_custom_call.1} parent=39 // pred_fallthru
          _
        // Predicated region
        $region45: #{tpu_custom_call.1} parent=39 // pred_check
          %p251 = pneg %p66
        $region46: #{tpu_custom_call.1} parent=39 // pred_check_branch
          %253 = sbr.rel (%p251) target = $region48
        $region47: #{tpu_custom_call.1} parent=39 // pred_region
          %254 = dma.done [#allocation7], 49152
        $region48: #{tpu_custom_call.1} parent=39 // pred_fallthru
          _
        // Predicated region
        $region49: #{tpu_custom_call.1} parent=39 // pred_check
          %p255 = pneg %p87
        $region50: #{tpu_custom_call.1} parent=39 // pred_check_branch
          %257 = sbr.rel (%p255) target = $region52
        $region51: #{tpu_custom_call.1} parent=39 // pred_region
          %258 = dma.done [#allocation7], 128
        $region52: #{tpu_custom_call.1} parent=39 // pred_fallthru
          _
        // Predicated region
        $region53: #{tpu_custom_call.1} parent=39 // pred_check
          %p259 = pneg %p129
        $region54: #{tpu_custom_call.1} parent=39 // pred_check_branch
          %261 = sbr.rel (%p259) target = $region56
        $region55: #{tpu_custom_call.1} parent=39 // pred_region
          %262 = dma.done [#allocation10], 16
        $region56: #{tpu_custom_call.1} parent=39 // pred_fallthru
          _
        %s263 = sand.u32 %s32, 1
        %s264 = scalar_lea.sflag [#allocation4], %s263
        %s265 = sand.u32 %s32, 1
        %s266 = smul.addr %s265, 16
        %s267 = scalar_lea.vmem [#allocation3], %s266
        %p268 = pneg %p45
        %p269 = pneg %p42
        %p270 = pneg %p66
        %p271 = pneg %p63
        %p272 = pneg %p87
        %p273 = pneg %p84
        %p274 = pneg %p108
        %p275 = pneg %p105
        %p276 = pneg %p129
        %p277 = pneg %p126
        %p278 = pneg %p155
        %p279 = pneg %p152
        %s280 = sand.u32 %s142, 1
        %s281 = scalar_lea.sflag [#allocation5], %s280
        %s282 = sand.u32 %s142, 1
        %s283 = smul.addr %s282, 16
        %s284 = scalar_lea.vmem [#allocation11], %s283
        %285 = vst [vmem:[#allocation2] sm:$0x1] 0.0
        %286 = vst [vmem:[#allocation2 + $0x11] sm:$0x1] 0.0
        %v287 = vld [vmem:[%s246] sm:$0xff]
        %v288 = vld [vmem:[%s246 + $0x8] sm:$0xff]
        %289 = vst [vmem:[#allocation2 + $0x1] sm:$0xff] %v287
        %290 = vst [vmem:[#allocation2 + $0x9] sm:$0xff] %v288
        loop: start=0, step=1, limit=4
        $region57: #{tpu_custom_call.1} parent=39 // loop_pre_header
          _
        $region58: #{tpu_custom_call.1} parent=39 // loop_header
          %s292 = sphi 0, %s296
          %p293 = scmp.ge.s32.totalorder %s292, 4
        $region59: #{tpu_custom_call.1} parent=39 // loop_header_branch
          %295 = sbr.rel (%p293) target = $region63
        $region60: #{tpu_custom_call.1} parent=39 // loop_body
          %v297 = vld [vmem:[#allocation2 + $0x1] sm:$0xff]
          %v298 = vld [vmem:[#allocation2 + $0x9] sm:$0xff]
          %s299 = smul.u32 %s292, 2
          %s300 = scalar_lea.vmem [#allocation8], %s299
          %v301 = vld [vmem:[%s300] sm:$0x1]
          %v302 = vld [vmem:[#allocation2] sm:$0xff]
          %v303 = vld [vmem:[#allocation2 + $0x8] sm:$0xff]
          %s304 = smul.u32 %s292, 768
          %s305 = scalar_lea.vmem [#allocation6], %s304
          %v306 = vld [vmem:[%s305] sm:$0xff]
          %v307 = vld [vmem:[%s305 + $0x8] sm:$0xff]
          %v308 = vld [vmem:[%s305 + $0x10] sm:$0xff]
          %v309 = vld [vmem:[%s305 + $0x18] sm:$0xff]
          %v310 = vld [vmem:[%s305 + $0x20] sm:$0xff]
          %v311 = vld [vmem:[%s305 + $0x28] sm:$0xff]
          %v312 = vld [vmem:[%s305 + $0x30] sm:$0xff]
          %v313 = vld [vmem:[%s305 + $0x38] sm:$0xff]
          %v314 = vld [vmem:[%s305 + $0x40] sm:$0xff]
          %v315 = vld [vmem:[%s305 + $0x48] sm:$0xff]
          %v316 = vld [vmem:[%s305 + $0x50] sm:$0xff]
          %v317 = vld [vmem:[%s305 + $0x58] sm:$0xff]
          %v318 = vld [vmem:[%s305 + $0x60] sm:$0xff]
          %v319 = vld [vmem:[%s305 + $0x68] sm:$0xff]
          %v320 = vld [vmem:[%s305 + $0x70] sm:$0xff]
          %v321 = vld [vmem:[%s305 + $0x78] sm:$0xff]
          %s322 = sadd.s32 128, %s304
          %s323 = scalar_lea.vmem [#allocation6], %s322
          %v324 = vld [vmem:[%s323] sm:$0xff]
          %v325 = vld [vmem:[%s323 + $0x8] sm:$0xff]
          %v326 = vld [vmem:[%s323 + $0x10] sm:$0xff]
          %v327 = vld [vmem:[%s323 + $0x18] sm:$0xff]
          %v328 = vld [vmem:[%s323 + $0x20] sm:$0xff]
          %v329 = vld [vmem:[%s323 + $0x28] sm:$0xff]
          %v330 = vld [vmem:[%s323 + $0x30] sm:$0xff]
          %v331 = vld [vmem:[%s323 + $0x38] sm:$0xff]
          %v332 = vld [vmem:[%s323 + $0x40] sm:$0xff]
          %v333 = vld [vmem:[%s323 + $0x48] sm:$0xff]
          %v334 = vld [vmem:[%s323 + $0x50] sm:$0xff]
          %v335 = vld [vmem:[%s323 + $0x58] sm:$0xff]
          %v336 = vld [vmem:[%s323 + $0x60] sm:$0xff]
          %v337 = vld [vmem:[%s323 + $0x68] sm:$0xff]
          %v338 = vld [vmem:[%s323 + $0x70] sm:$0xff]
          %v339 = vld [vmem:[%s323 + $0x78] sm:$0xff]
          %340 = vmatprep.subr.mxu0 0.0
          %341 = vmatpush1.msra.mxu0 %v324
          %342 = vmatprep.subr.mxu0 0.0
          %343 = vmatpush1.msra.mxu0 %v325
          %344 = vmatprep.subr.mxu0 0.0
          %345 = vmatpush1.msra.mxu0 %v326
          %346 = vmatprep.subr.mxu0 0.0
          %347 = vmatpush1.msra.mxu0 %v327
          %348 = vmatprep.subr.mxu0 0.0
          %349 = vmatpush1.msra.mxu0 %v328
          %350 = vmatprep.subr.mxu0 0.0
          %351 = vmatpush1.msra.mxu0 %v329
          %352 = vmatprep.subr.mxu0 0.0
          %353 = vmatpush1.msra.mxu0 %v330
          %354 = vmatprep.subr.mxu0 0.0
          %355 = vmatpush1.msra.mxu0 %v331
          %356 = vmatprep.subr.mxu0 0.0
          %357 = vmatpush1.msra.mxu0 %v332
          %358 = vmatprep.subr.mxu0 0.0
          %359 = vmatpush1.msra.mxu0 %v333
          %360 = vmatprep.subr.mxu0 0.0
          %361 = vmatpush1.msra.mxu0 %v334
          %362 = vmatprep.subr.mxu0 0.0
          %363 = vmatpush1.msra.mxu0 %v335
          %364 = vmatprep.subr.mxu0 0.0
          %365 = vmatpush1.msra.mxu0 %v336
          %366 = vmatprep.subr.mxu0 0.0
          %367 = vmatpush1.msra.mxu0 %v337
          %368 = vmatprep.subr.mxu0 0.0
          %369 = vmatpush1.msra.mxu0 %v338
          %370 = vmatprep.subr.mxu0 0.0
          %371 = vmatpush1.msra.mxu0 %v339
          %372 = vmatprep.subr.mxu0 0.0
          %373 = vmatpush1.msra.mxu0 0.0
          %374 = vmatprep.subr.mxu0 0.0
          %375 = vmatpush1.msra.mxu0 0.0
          %376 = vmatprep.subr.mxu0 0.0
          %377 = vmatpush1.msra.mxu0 0.0
          %378 = vmatprep.subr.mxu0 0.0
          %379 = vmatpush1.msra.mxu0 0.0
          %380 = vmatprep.subr.mxu0 0.0
          %381 = vmatpush1.msra.mxu0 0.0
          %382 = vmatprep.subr.mxu0 0.0
          %383 = vmatpush1.msra.mxu0 0.0
          %384 = vmatprep.subr.mxu0 0.0
          %385 = vmatpush1.msra.mxu0 0.0
          %386 = vmatprep.subr.mxu0 0.0
          %387 = vmatpush1.msra.mxu0 0.0
          %388 = vmatprep.subr.mxu0 0.0
          %389 = vmatpush1.msra.mxu0 0.0
          %390 = vmatprep.subr.mxu0 0.0
          %391 = vmatpush1.msra.mxu0 0.0
          %392 = vmatprep.subr.mxu0 0.0
          %393 = vmatpush1.msra.mxu0 0.0
          %394 = vmatprep.subr.mxu0 0.0
          %395 = vmatpush1.msra.mxu0 0.0
          %396 = vmatprep.subr.mxu0 0.0
          %397 = vmatpush1.msra.mxu0 0.0
          %398 = vmatprep.subr.mxu0 0.0
          %399 = vmatpush1.msra.mxu0 0.0
          %400 = vmatprep.subr.mxu0 0.0
          %401 = vmatpush1.msra.mxu0 0.0
          %402 = vmatprep.subr.mxu0 0.0
          %403 = vmatpush1.msra.mxu0 0.0
          %404 = vmatprep.mubr.f32.mxu0 0.0
          %405 = vmatmul.mubr.f32.gmra.mrb[0].mxu0 %v297
          %v406 = vpop.f32.mrb[0].mxu0
          %v407 = vadd.f32 0.0, %v406
          %v408 = vpop.f32.mrb[0].mxu0
          %409 = vmatprep.mubr.f32.mxu0 0.0
          %410 = vmatmul.mubr.f32.gmra.mrb[0].mxu0 %v298
          %v411 = vpop.f32.mrb[0].mxu0
          %v412 = vadd.f32 0.0, %v411
          %v413 = vpop.f32.mrb[0].mxu0
          %414 = vdwg.mxu0
          %415 = vmatprep.subr.mxu0 0.0
          %416 = vmatpush1.msra.mxu0 %v306
          %417 = vmatprep.subr.mxu0 0.0
          %418 = vmatpush1.msra.mxu0 %v307
          %419 = vmatprep.subr.mxu0 0.0
          %420 = vmatpush1.msra.mxu0 %v308
          %421 = vmatprep.subr.mxu0 0.0
          %422 = vmatpush1.msra.mxu0 %v309
          %423 = vmatprep.subr.mxu0 0.0
          %424 = vmatpush1.msra.mxu0 %v310
          %425 = vmatprep.subr.mxu0 0.0
          %426 = vmatpush1.msra.mxu0 %v311
          %427 = vmatprep.subr.mxu0 0.0
          %428 = vmatpush1.msra.mxu0 %v312
          %429 = vmatprep.subr.mxu0 0.0
          %430 = vmatpush1.msra.mxu0 %v313
          %431 = vmatprep.subr.mxu0 0.0
          %432 = vmatpush1.msra.mxu0 %v314
          %433 = vmatprep.subr.mxu0 0.0
          %434 = vmatpush1.msra.mxu0 %v315
          %435 = vmatprep.subr.mxu0 0.0
          %436 = vmatpush1.msra.mxu0 %v316
          %437 = vmatprep.subr.mxu0 0.0
          %438 = vmatpush1.msra.mxu0 %v317
          %439 = vmatprep.subr.mxu0 0.0
          %440 = vmatpush1.msra.mxu0 %v318
          %441 = vmatprep.subr.mxu0 0.0
          %442 = vmatpush1.msra.mxu0 %v319
          %443 = vmatprep.subr.mxu0 0.0
          %444 = vmatpush1.msra.mxu0 %v320
          %445 = vmatprep.subr.mxu0 0.0
          %446 = vmatpush1.msra.mxu0 %v321
          %447 = vmatprep.subr.mxu0 0.0
          %448 = vmatpush1.msra.mxu0 0.0
          %449 = vmatprep.subr.mxu0 0.0
          %450 = vmatpush1.msra.mxu0 0.0
          %451 = vmatprep.subr.mxu0 0.0
          %452 = vmatpush1.msra.mxu0 0.0
          %453 = vmatprep.subr.mxu0 0.0
          %454 = vmatpush1.msra.mxu0 0.0
          %455 = vmatprep.subr.mxu0 0.0
          %456 = vmatpush1.msra.mxu0 0.0
          %457 = vmatprep.subr.mxu0 0.0
          %458 = vmatpush1.msra.mxu0 0.0
          %459 = vmatprep.subr.mxu0 0.0
          %460 = vmatpush1.msra.mxu0 0.0
          %461 = vmatprep.subr.mxu0 0.0
          %462 = vmatpush1.msra.mxu0 0.0
          %463 = vmatprep.subr.mxu0 0.0
          %464 = vmatpush1.msra.mxu0 0.0
          %465 = vmatprep.subr.mxu0 0.0
          %466 = vmatpush1.msra.mxu0 0.0
          %467 = vmatprep.subr.mxu0 0.0
          %468 = vmatpush1.msra.mxu0 0.0
          %469 = vmatprep.subr.mxu0 0.0
          %470 = vmatpush1.msra.mxu0 0.0
          %471 = vmatprep.subr.mxu0 0.0
          %472 = vmatpush1.msra.mxu0 0.0
          %473 = vmatprep.subr.mxu0 0.0
          %474 = vmatpush1.msra.mxu0 0.0
          %475 = vmatprep.subr.mxu0 0.0
          %476 = vmatpush1.msra.mxu0 0.0
          %477 = vmatprep.subr.mxu0 0.0
          %478 = vmatpush1.msra.mxu0 0.0
          %479 = vmatprep.mubr.f32.mxu0 0.0
          %480 = vmatmul.mubr.f32.gmra.mrb[0].mxu0 %v302
          %v481 = vpop.f32.mrb[0].mxu0
          %v482 = vadd.f32 %v407, %v481
          %v483 = vpop.f32.mrb[0].mxu0
          %484 = vmatprep.mubr.f32.mxu0 0.0
          %485 = vmatmul.mubr.f32.gmra.mrb[0].mxu0 %v303
          %v486 = vpop.f32.mrb[0].mxu0
          %v487 = vadd.f32 %v412, %v486
          %v488 = vpop.f32.mrb[0].mxu0
          %489 = vdwg.mxu0
          %v490 = vld [vmem:[#allocation2 + $0x2] sm:$0xff]
          %v491 = vld [vmem:[#allocation2 + $0xa] sm:$0xff]
          %s492 = sadd.s32 256, %s304
          %s493 = scalar_lea.vmem [#allocation6], %s492
          %v494 = vld [vmem:[%s493] sm:$0xff]
          %v495 = vld [vmem:[%s493 + $0x8] sm:$0xff]
          %v496 = vld [vmem:[%s493 + $0x10] sm:$0xff]
          %v497 = vld [vmem:[%s493 + $0x18] sm:$0xff]
          %v498 = vld [vmem:[%s493 + $0x20] sm:$0xff]
          %v499 = vld [vmem:[%s493 + $0x28] sm:$0xff]
          %v500 = vld [vmem:[%s493 + $0x30] sm:$0xff]
          %v501 = vld [vmem:[%s493 + $0x38] sm:$0xff]
          %v502 = vld [vmem:[%s493 + $0x40] sm:$0xff]
          %v503 = vld [vmem:[%s493 + $0x48] sm:$0xff]
          %v504 = vld [vmem:[%s493 + $0x50] sm:$0xff]
          %v505 = vld [vmem:[%s493 + $0x58] sm:$0xff]
          %v506 = vld [vmem:[%s493 + $0x60] sm:$0xff]
          %v507 = vld [vmem:[%s493 + $0x68] sm:$0xff]
          %v508 = vld [vmem:[%s493 + $0x70] sm:$0xff]
          %v509 = vld [vmem:[%s493 + $0x78] sm:$0xff]
          %510 = vmatprep.subr.mxu0 0.0
          %511 = vmatpush1.msra.mxu0 %v494
          %512 = vmatprep.subr.mxu0 0.0
          %513 = vmatpush1.msra.mxu0 %v495
          %514 = vmatprep.subr.mxu0 0.0
          %515 = vmatpush1.msra.mxu0 %v496
          %516 = vmatprep.subr.mxu0 0.0
          %517 = vmatpush1.msra.mxu0 %v497
          %518 = vmatprep.subr.mxu0 0.0
          %519 = vmatpush1.msra.mxu0 %v498
          %520 = vmatprep.subr.mxu0 0.0
          %521 = vmatpush1.msra.mxu0 %v499
          %522 = vmatprep.subr.mxu0 0.0
          %523 = vmatpush1.msra.mxu0 %v500
          %524 = vmatprep.subr.mxu0 0.0
          %525 = vmatpush1.msra.mxu0 %v501
          %526 = vmatprep.subr.mxu0 0.0
          %527 = vmatpush1.msra.mxu0 %v502
          %528 = vmatprep.subr.mxu0 0.0
          %529 = vmatpush1.msra.mxu0 %v503
          %530 = vmatprep.subr.mxu0 0.0
          %531 = vmatpush1.msra.mxu0 %v504
          %532 = vmatprep.subr.mxu0 0.0
          %533 = vmatpush1.msra.mxu0 %v505
          %534 = vmatprep.subr.mxu0 0.0
          %535 = vmatpush1.msra.mxu0 %v506
          %536 = vmatprep.subr.mxu0 0.0
          %537 = vmatpush1.msra.mxu0 %v507
          %538 = vmatprep.subr.mxu0 0.0
          %539 = vmatpush1.msra.mxu0 %v508
          %540 = vmatprep.subr.mxu0 0.0
          %541 = vmatpush1.msra.mxu0 %v509
          %542 = vmatprep.subr.mxu0 0.0
          %543 = vmatpush1.msra.mxu0 0.0
          %544 = vmatprep.subr.mxu0 0.0
          %545 = vmatpush1.msra.mxu0 0.0
          %546 = vmatprep.subr.mxu0 0.0
          %547 = vmatpush1.msra.mxu0 0.0
          %548 = vmatprep.subr.mxu0 0.0
          %549 = vmatpush1.msra.mxu0 0.0
          %550 = vmatprep.subr.mxu0 0.0
          %551 = vmatpush1.msra.mxu0 0.0
          %552 = vmatprep.subr.mxu0 0.0
          %553 = vmatpush1.msra.mxu0 0.0
          %554 = vmatprep.subr.mxu0 0.0
          %555 = vmatpush1.msra.mxu0 0.0
          %556 = vmatprep.subr.mxu0 0.0
          %557 = vmatpush1.msra.mxu0 0.0
          %558 = vmatprep.subr.mxu0 0.0
          %559 = vmatpush1.msra.mxu0 0.0
          %560 = vmatprep.subr.mxu0 0.0
          %561 = vmatpush1.msra.mxu0 0.0
          %562 = vmatprep.subr.mxu0 0.0
          %563 = vmatpush1.msra.mxu0 0.0
          %564 = vmatprep.subr.mxu0 0.0
          %565 = vmatpush1.msra.mxu0 0.0
          %566 = vmatprep.subr.mxu0 0.0
          %567 = vmatpush1.msra.mxu0 0.0
          %568 = vmatprep.subr.mxu0 0.0
          %569 = vmatpush1.msra.mxu0 0.0
          %570 = vmatprep.subr.mxu0 0.0
          %571 = vmatpush1.msra.mxu0 0.0
          %572 = vmatprep.subr.mxu0 0.0
          %573 = vmatpush1.msra.mxu0 0.0
          %574 = vmatprep.mubr.f32.mxu0 0.0
          %575 = vmatmul.mubr.f32.gmra.mrb[0].mxu0 %v490
          %v576 = vpop.f32.mrb[0].mxu0
          %v577 = vadd.f32 0.0, %v576
          %v578 = vpop.f32.mrb[0].mxu0
          %579 = vmatprep.mubr.f32.mxu0 0.0
          %580 = vmatmul.mubr.f32.gmra.mrb[0].mxu0 %v491
          %v581 = vpop.f32.mrb[0].mxu0
          %v582 = vadd.f32 0.0, %v581
          %v583 = vpop.f32.mrb[0].mxu0
          %584 = vdwg.mxu0
          %v585 = vadd.f32 %v482, %v577
          %v586 = vadd.f32 %v487, %v582
          %v588 = vlaneseq
          %v589 = vshrl.u32 %v588, 7
          %v590 = vsub.s32 0, %v589
          %v591 = vrot.slane %v301, %v590
          %v593 = vadd.f32 %v585, %v591
          %v594 = vadd.f32 %v586, %v591
          %v595 = vmax.f32 %v593, 0.0
          %v596 = vmax.f32 %v594, 0.0
          %597 = vst [vmem:[#allocation2 + $0x1] sm:$0xff] %v595
          %598 = vst [vmem:[#allocation2 + $0x9] sm:$0xff] %v596
          %s599 = sadd.s32 1, %s299
          %s600 = scalar_lea.vmem [#allocation8], %s599
          %v601 = vld [vmem:[%s600] sm:$0x1]
          %v602 = vld [vmem:[#allocation2] sm:$0xff]
          %v603 = vld [vmem:[#allocation2 + $0x8] sm:$0xff]
          %s604 = sadd.s32 384, %s304
          %s605 = scalar_lea.vmem [#allocation6], %s604
          %v606 = vld [vmem:[%s605] sm:$0xff]
          %v607 = vld [vmem:[%s605 + $0x8] sm:$0xff]
          %v608 = vld [vmem:[%s605 + $0x10] sm:$0xff]
          %v609 = vld [vmem:[%s605 + $0x18] sm:$0xff]
          %v610 = vld [vmem:[%s605 + $0x20] sm:$0xff]
          %v611 = vld [vmem:[%s605 + $0x28] sm:$0xff]
          %v612 = vld [vmem:[%s605 + $0x30] sm:$0xff]
          %v613 = vld [vmem:[%s605 + $0x38] sm:$0xff]
          %v614 = vld [vmem:[%s605 + $0x40] sm:$0xff]
          %v615 = vld [vmem:[%s605 + $0x48] sm:$0xff]
          %v616 = vld [vmem:[%s605 + $0x50] sm:$0xff]
          %v617 = vld [vmem:[%s605 + $0x58] sm:$0xff]
          %v618 = vld [vmem:[%s605 + $0x60] sm:$0xff]
          %v619 = vld [vmem:[%s605 + $0x68] sm:$0xff]
          %v620 = vld [vmem:[%s605 + $0x70] sm:$0xff]
          %v621 = vld [vmem:[%s605 + $0x78] sm:$0xff]
          %v622 = vld [vmem:[#allocation2 + $0x1] sm:$0xff]
          %v623 = vld [vmem:[#allocation2 + $0x9] sm:$0xff]
          %s624 = sadd.s32 512, %s304
          %s625 = scalar_lea.vmem [#allocation6], %s624
          %v626 = vld [vmem:[%s625] sm:$0xff]
          %v627 = vld [vmem:[%s625 + $0x8] sm:$0xff]
          %v628 = vld [vmem:[%s625 + $0x10] sm:$0xff]
          %v629 = vld [vmem:[%s625 + $0x18] sm:$0xff]
          %v630 = vld [vmem:[%s625 + $0x20] sm:$0xff]
          %v631 = vld [vmem:[%s625 + $0x28] sm:$0xff]
          %v632 = vld [vmem:[%s625 + $0x30] sm:$0xff]
          %v633 = vld [vmem:[%s625 + $0x38] sm:$0xff]
          %v634 = vld [vmem:[%s625 + $0x40] sm:$0xff]
          %v635 = vld [vmem:[%s625 + $0x48] sm:$0xff]
          %v636 = vld [vmem:[%s625 + $0x50] sm:$0xff]
          %v637 = vld [vmem:[%s625 + $0x58] sm:$0xff]
          %v638 = vld [vmem:[%s625 + $0x60] sm:$0xff]
          %v639 = vld [vmem:[%s625 + $0x68] sm:$0xff]
          %v640 = vld [vmem:[%s625 + $0x70] sm:$0xff]
          %v641 = vld [vmem:[%s625 + $0x78] sm:$0xff]
          %642 = vmatprep.subr.mxu0 0.0
          %643 = vmatpush1.msra.mxu0 %v626
          %644 = vmatprep.subr.mxu0 0.0
          %645 = vmatpush1.msra.mxu0 %v627
          %646 = vmatprep.subr.mxu0 0.0
          %647 = vmatpush1.msra.mxu0 %v628
          %648 = vmatprep.subr.mxu0 0.0
          %649 = vmatpush1.msra.mxu0 %v629
          %650 = vmatprep.subr.mxu0 0.0
          %651 = vmatpush1.msra.mxu0 %v630
          %652 = vmatprep.subr.mxu0 0.0
          %653 = vmatpush1.msra.mxu0 %v631
          %654 = vmatprep.subr.mxu0 0.0
          %655 = vmatpush1.msra.mxu0 %v632
          %656 = vmatprep.subr.mxu0 0.0
          %657 = vmatpush1.msra.mxu0 %v633
          %658 = vmatprep.subr.mxu0 0.0
          %659 = vmatpush1.msra.mxu0 %v634
          %660 = vmatprep.subr.mxu0 0.0
          %661 = vmatpush1.msra.mxu0 %v635
          %662 = vmatprep.subr.mxu0 0.0
          %663 = vmatpush1.msra.mxu0 %v636
          %664 = vmatprep.subr.mxu0 0.0
          %665 = vmatpush1.msra.mxu0 %v637
          %666 = vmatprep.subr.mxu0 0.0
          %667 = vmatpush1.msra.mxu0 %v638
          %668 = vmatprep.subr.mxu0 0.0
          %669 = vmatpush1.msra.mxu0 %v639
          %670 = vmatprep.subr.mxu0 0.0
          %671 = vmatpush1.msra.mxu0 %v640
          %672 = vmatprep.subr.mxu0 0.0
          %673 = vmatpush1.msra.mxu0 %v641
          %674 = vmatprep.subr.mxu0 0.0
          %675 = vmatpush1.msra.mxu0 0.0
          %676 = vmatprep.subr.mxu0 0.0
          %677 = vmatpush1.msra.mxu0 0.0
          %678 = vmatprep.subr.mxu0 0.0
          %679 = vmatpush1.msra.mxu0 0.0
          %680 = vmatprep.subr.mxu0 0.0
          %681 = vmatpush1.msra.mxu0 0.0
          %682 = vmatprep.subr.mxu0 0.0
          %683 = vmatpush1.msra.mxu0 0.0
          %684 = vmatprep.subr.mxu0 0.0
          %685 = vmatpush1.msra.mxu0 0.0
          %686 = vmatprep.subr.mxu0 0.0
          %687 = vmatpush1.msra.mxu0 0.0
          %688 = vmatprep.subr.mxu0 0.0
          %689 = vmatpush1.msra.mxu0 0.0
          %690 = vmatprep.subr.mxu0 0.0
          %691 = vmatpush1.msra.mxu0 0.0
          %692 = vmatprep.subr.mxu0 0.0
          %693 = vmatpush1.msra.mxu0 0.0
          %694 = vmatprep.subr.mxu0 0.0
          %695 = vmatpush1.msra.mxu0 0.0
          %696 = vmatprep.subr.mxu0 0.0
          %697 = vmatpush1.msra.mxu0 0.0
          %698 = vmatprep.subr.mxu0 0.0
          %699 = vmatpush1.msra.mxu0 0.0
          %700 = vmatprep.subr.mxu0 0.0
          %701 = vmatpush1.msra.mxu0 0.0
          %702 = vmatprep.subr.mxu0 0.0
          %703 = vmatpush1.msra.mxu0 0.0
          %704 = vmatprep.subr.mxu0 0.0
          %705 = vmatpush1.msra.mxu0 0.0
          %706 = vmatprep.mubr.f32.mxu0 0.0
          %707 = vmatmul.mubr.f32.gmra.mrb[0].mxu0 %v622
          %v708 = vpop.f32.mrb[0].mxu0
          %v709 = vadd.f32 0.0, %v708
          %v710 = vpop.f32.mrb[0].mxu0
          %711 = vmatprep.mubr.f32.mxu0 0.0
          %712 = vmatmul.mubr.f32.gmra.mrb[0].mxu0 %v623
          %v713 = vpop.f32.mrb[0].mxu0
          %v714 = vadd.f32 0.0, %v713
          %v715 = vpop.f32.mrb[0].mxu0
          %716 = vdwg.mxu0
          %717 = vmatprep.subr.mxu0 0.0
          %718 = vmatpush1.msra.mxu0 %v606
          %719 = vmatprep.subr.mxu0 0.0
          %720 = vmatpush1.msra.mxu0 %v607
          %721 = vmatprep.subr.mxu0 0.0
          %722 = vmatpush1.msra.mxu0 %v608
          %723 = vmatprep.subr.mxu0 0.0
          %724 = vmatpush1.msra.mxu0 %v609
          %725 = vmatprep.subr.mxu0 0.0
          %726 = vmatpush1.msra.mxu0 %v610
          %727 = vmatprep.subr.mxu0 0.0
          %728 = vmatpush1.msra.mxu0 %v611
          %729 = vmatprep.subr.mxu0 0.0
          %730 = vmatpush1.msra.mxu0 %v612
          %731 = vmatprep.subr.mxu0 0.0
          %732 = vmatpush1.msra.mxu0 %v613
          %733 = vmatprep.subr.mxu0 0.0
          %734 = vmatpush1.msra.mxu0 %v614
          %735 = vmatprep.subr.mxu0 0.0
          %736 = vmatpush1.msra.mxu0 %v615
          %737 = vmatprep.subr.mxu0 0.0
          %738 = vmatpush1.msra.mxu0 %v616
          %739 = vmatprep.subr.mxu0 0.0
          %740 = vmatpush1.msra.mxu0 %v617
          %741 = vmatprep.subr.mxu0 0.0
          %742 = vmatpush1.msra.mxu0 %v618
          %743 = vmatprep.subr.mxu0 0.0
          %744 = vmatpush1.msra.mxu0 %v619
          %745 = vmatprep.subr.mxu0 0.0
          %746 = vmatpush1.msra.mxu0 %v620
          %747 = vmatprep.subr.mxu0 0.0
          %748 = vmatpush1.msra.mxu0 %v621
          %749 = vmatprep.subr.mxu0 0.0
          %750 = vmatpush1.msra.mxu0 0.0
          %751 = vmatprep.subr.mxu0 0.0
          %752 = vmatpush1.msra.mxu0 0.0
          %753 = vmatprep.subr.mxu0 0.0
          %754 = vmatpush1.msra.mxu0 0.0
          %755 = vmatprep.subr.mxu0 0.0
          %756 = vmatpush1.msra.mxu0 0.0
          %757 = vmatprep.subr.mxu0 0.0
          %758 = vmatpush1.msra.mxu0 0.0
          %759 = vmatprep.subr.mxu0 0.0
          %760 = vmatpush1.msra.mxu0 0.0
          %761 = vmatprep.subr.mxu0 0.0
          %762 = vmatpush1.msra.mxu0 0.0
          %763 = vmatprep.subr.mxu0 0.0
          %764 = vmatpush1.msra.mxu0 0.0
          %765 = vmatprep.subr.mxu0 0.0
          %766 = vmatpush1.msra.mxu0 0.0
          %767 = vmatprep.subr.mxu0 0.0
          %768 = vmatpush1.msra.mxu0 0.0
          %769 = vmatprep.subr.mxu0 0.0
          %770 = vmatpush1.msra.mxu0 0.0
          %771 = vmatprep.subr.mxu0 0.0
          %772 = vmatpush1.msra.mxu0 0.0
          %773 = vmatprep.subr.mxu0 0.0
          %774 = vmatpush1.msra.mxu0 0.0
          %775 = vmatprep.subr.mxu0 0.0
          %776 = vmatpush1.msra.mxu0 0.0
          %777 = vmatprep.subr.mxu0 0.0
          %778 = vmatpush1.msra.mxu0 0.0
          %779 = vmatprep.subr.mxu0 0.0
          %780 = vmatpush1.msra.mxu0 0.0
          %781 = vmatprep.mubr.f32.mxu0 0.0
          %782 = vmatmul.mubr.f32.gmra.mrb[0].mxu0 %v602
          %v783 = vpop.f32.mrb[0].mxu0
          %v784 = vadd.f32 %v709, %v783
          %v785 = vpop.f32.mrb[0].mxu0
          %786 = vmatprep.mubr.f32.mxu0 0.0
          %787 = vmatmul.mubr.f32.gmra.mrb[0].mxu0 %v603
          %v788 = vpop.f32.mrb[0].mxu0
          %v789 = vadd.f32 %v714, %v788
          %v790 = vpop.f32.mrb[0].mxu0
          %791 = vdwg.mxu0
          %v792 = vld [vmem:[#allocation2 + $0x2] sm:$0xff]
          %v793 = vld [vmem:[#allocation2 + $0xa] sm:$0xff]
          %s794 = sadd.s32 640, %s304
          %s795 = scalar_lea.vmem [#allocation6], %s794
          %v796 = vld [vmem:[%s795] sm:$0xff]
          %v797 = vld [vmem:[%s795 + $0x8] sm:$0xff]
          %v798 = vld [vmem:[%s795 + $0x10] sm:$0xff]
          %v799 = vld [vmem:[%s795 + $0x18] sm:$0xff]
          %v800 = vld [vmem:[%s795 + $0x20] sm:$0xff]
          %v801 = vld [vmem:[%s795 + $0x28] sm:$0xff]
          %v802 = vld [vmem:[%s795 + $0x30] sm:$0xff]
          %v803 = vld [vmem:[%s795 + $0x38] sm:$0xff]
          %v804 = vld [vmem:[%s795 + $0x40] sm:$0xff]
          %v805 = vld [vmem:[%s795 + $0x48] sm:$0xff]
          %v806 = vld [vmem:[%s795 + $0x50] sm:$0xff]
          %v807 = vld [vmem:[%s795 + $0x58] sm:$0xff]
          %v808 = vld [vmem:[%s795 + $0x60] sm:$0xff]
          %v809 = vld [vmem:[%s795 + $0x68] sm:$0xff]
          %v810 = vld [vmem:[%s795 + $0x70] sm:$0xff]
          %v811 = vld [vmem:[%s795 + $0x78] sm:$0xff]
          %812 = vmatprep.subr.mxu0 0.0
          %813 = vmatpush1.msra.mxu0 %v796
          %814 = vmatprep.subr.mxu0 0.0
          %815 = vmatpush1.msra.mxu0 %v797
          %816 = vmatprep.subr.mxu0 0.0
          %817 = vmatpush1.msra.mxu0 %v798
          %818 = vmatprep.subr.mxu0 0.0
          %819 = vmatpush1.msra.mxu0 %v799
          %820 = vmatprep.subr.mxu0 0.0
          %821 = vmatpush1.msra.mxu0 %v800
          %822 = vmatprep.subr.mxu0 0.0
          %823 = vmatpush1.msra.mxu0 %v801
          %824 = vmatprep.subr.mxu0 0.0
          %825 = vmatpush1.msra.mxu0 %v802
          %826 = vmatprep.subr.mxu0 0.0
          %827 = vmatpush1.msra.mxu0 %v803
          %828 = vmatprep.subr.mxu0 0.0
          %829 = vmatpush1.msra.mxu0 %v804
          %830 = vmatprep.subr.mxu0 0.0
          %831 = vmatpush1.msra.mxu0 %v805
          %832 = vmatprep.subr.mxu0 0.0
          %833 = vmatpush1.msra.mxu0 %v806
          %834 = vmatprep.subr.mxu0 0.0
          %835 = vmatpush1.msra.mxu0 %v807
          %836 = vmatprep.subr.mxu0 0.0
          %837 = vmatpush1.msra.mxu0 %v808
          %838 = vmatprep.subr.mxu0 0.0
          %839 = vmatpush1.msra.mxu0 %v809
          %840 = vmatprep.subr.mxu0 0.0
          %841 = vmatpush1.msra.mxu0 %v810
          %842 = vmatprep.subr.mxu0 0.0
          %843 = vmatpush1.msra.mxu0 %v811
          %844 = vmatprep.subr.mxu0 0.0
          %845 = vmatpush1.msra.mxu0 0.0
          %846 = vmatprep.subr.mxu0 0.0
          %847 = vmatpush1.msra.mxu0 0.0
          %848 = vmatprep.subr.mxu0 0.0
          %849 = vmatpush1.msra.mxu0 0.0
          %850 = vmatprep.subr.mxu0 0.0
          %851 = vmatpush1.msra.mxu0 0.0
          %852 = vmatprep.subr.mxu0 0.0
          %853 = vmatpush1.msra.mxu0 0.0
          %854 = vmatprep.subr.mxu0 0.0
          %855 = vmatpush1.msra.mxu0 0.0
          %856 = vmatprep.subr.mxu0 0.0
          %857 = vmatpush1.msra.mxu0 0.0
          %858 = vmatprep.subr.mxu0 0.0
          %859 = vmatpush1.msra.mxu0 0.0
          %860 = vmatprep.subr.mxu0 0.0
          %861 = vmatpush1.msra.mxu0 0.0
          %862 = vmatprep.subr.mxu0 0.0
          %863 = vmatpush1.msra.mxu0 0.0
          %864 = vmatprep.subr.mxu0 0.0
          %865 = vmatpush1.msra.mxu0 0.0
          %866 = vmatprep.subr.mxu0 0.0
          %867 = vmatpush1.msra.mxu0 0.0
          %868 = vmatprep.subr.mxu0 0.0
          %869 = vmatpush1.msra.mxu0 0.0
          %870 = vmatprep.subr.mxu0 0.0
          %871 = vmatpush1.msra.mxu0 0.0
          %872 = vmatprep.subr.mxu0 0.0
          %873 = vmatpush1.msra.mxu0 0.0
          %874 = vmatprep.subr.mxu0 0.0
          %875 = vmatpush1.msra.mxu0 0.0
          %876 = vmatprep.mubr.f32.mxu0 0.0
          %877 = vmatmul.mubr.f32.gmra.mrb[0].mxu0 %v792
          %v878 = vpop.f32.mrb[0].mxu0
          %v879 = vadd.f32 0.0, %v878
          %v880 = vpop.f32.mrb[0].mxu0
          %881 = vmatprep.mubr.f32.mxu0 0.0
          %882 = vmatmul.mubr.f32.gmra.mrb[0].mxu0 %v793
          %v883 = vpop.f32.mrb[0].mxu0
          %v884 = vadd.f32 0.0, %v883
          %v885 = vpop.f32.mrb[0].mxu0
          %886 = vdwg.mxu0
          %v887 = vadd.f32 %v784, %v879
          %v888 = vadd.f32 %v789, %v884
          %v890 = vlaneseq
          %v891 = vshrl.u32 %v890, 7
          %v892 = vsub.s32 0, %v891
          %v893 = vrot.slane %v601, %v892
          %v895 = vadd.f32 %v887, %v893
          %v896 = vadd.f32 %v888, %v893
          %v897 = vadd.f32 %v895, %v297
          %v898 = vadd.f32 %v896, %v298
          %899 = vst [vmem:[#allocation2 + $0x1] sm:$0xff] %v897
          %900 = vst [vmem:[#allocation2 + $0x9] sm:$0xff] %v898
        $region61: #{tpu_custom_call.1} parent=39 // loop_footer
          %s296 = sadd.s32 1, %s292
        $region62: #{tpu_custom_call.1} parent=39 // loop_footer_branch
          %291 = sbr.rel target = $region58
        $region63: #{tpu_custom_call.1} parent=39 // loop_exit
          _
        %v901 = vld [vmem:[#allocation9] sm:$0x1]
        %v902 = vld [vmem:[#allocation2] sm:$0xff]
        %v903 = vld [vmem:[#allocation2 + $0x8] sm:$0xff]
        %v904 = vld [vmem:[%s3] sm:$0xff]
        %v905 = vld [vmem:[%s3 + $0x8] sm:$0xff]
        %v906 = vld [vmem:[%s3 + $0x10] sm:$0xff]
        %v907 = vld [vmem:[%s3 + $0x18] sm:$0xff]
        %v908 = vld [vmem:[%s3 + $0x20] sm:$0xff]
        %v909 = vld [vmem:[%s3 + $0x28] sm:$0xff]
        %v910 = vld [vmem:[%s3 + $0x30] sm:$0xff]
        %v911 = vld [vmem:[%s3 + $0x38] sm:$0xff]
        %v912 = vld [vmem:[%s3 + $0x40] sm:$0xff]
        %v913 = vld [vmem:[%s3 + $0x48] sm:$0xff]
        %v914 = vld [vmem:[%s3 + $0x50] sm:$0xff]
        %v915 = vld [vmem:[%s3 + $0x58] sm:$0xff]
        %v916 = vld [vmem:[%s3 + $0x60] sm:$0xff]
        %v917 = vld [vmem:[%s3 + $0x68] sm:$0xff]
        %v918 = vld [vmem:[%s3 + $0x70] sm:$0xff]
        %v919 = vld [vmem:[%s3 + $0x78] sm:$0xff]
        %v920 = vld [vmem:[#allocation2 + $0x1] sm:$0xff]
        %v921 = vld [vmem:[#allocation2 + $0x9] sm:$0xff]
        %s922 = scalar_lea.vmem %s3, 128
        %v923 = vld [vmem:[%s922] sm:$0xff]
        %v924 = vld [vmem:[%s922 + $0x8] sm:$0xff]
        %v925 = vld [vmem:[%s922 + $0x10] sm:$0xff]
        %v926 = vld [vmem:[%s922 + $0x18] sm:$0xff]
        %v927 = vld [vmem:[%s922 + $0x20] sm:$0xff]
        %v928 = vld [vmem:[%s922 + $0x28] sm:$0xff]
        %v929 = vld [vmem:[%s922 + $0x30] sm:$0xff]
        %v930 = vld [vmem:[%s922 + $0x38] sm:$0xff]
        %v931 = vld [vmem:[%s922 + $0x40] sm:$0xff]
        %v932 = vld [vmem:[%s922 + $0x48] sm:$0xff]
        %v933 = vld [vmem:[%s922 + $0x50] sm:$0xff]
        %v934 = vld [vmem:[%s922 + $0x58] sm:$0xff]
        %v935 = vld [vmem:[%s922 + $0x60] sm:$0xff]
        %v936 = vld [vmem:[%s922 + $0x68] sm:$0xff]
        %v937 = vld [vmem:[%s922 + $0x70] sm:$0xff]
        %v938 = vld [vmem:[%s922 + $0x78] sm:$0xff]
        %939 = vmatprep.subr.mxu0 0.0
        %940 = vmatpush1.msra.mxu0 %v923
        %941 = vmatprep.subr.mxu0 0.0
        %942 = vmatpush1.msra.mxu0 %v924
        %943 = vmatprep.subr.mxu0 0.0
        %944 = vmatpush1.msra.mxu0 %v925
        %945 = vmatprep.subr.mxu0 0.0
        %946 = vmatpush1.msra.mxu0 %v926
        %947 = vmatprep.subr.mxu0 0.0
        %948 = vmatpush1.msra.mxu0 %v927
        %949 = vmatprep.subr.mxu0 0.0
        %950 = vmatpush1.msra.mxu0 %v928
        %951 = vmatprep.subr.mxu0 0.0
        %952 = vmatpush1.msra.mxu0 %v929
        %953 = vmatprep.subr.mxu0 0.0
        %954 = vmatpush1.msra.mxu0 %v930
        %955 = vmatprep.subr.mxu0 0.0
        %956 = vmatpush1.msra.mxu0 %v931
        %957 = vmatprep.subr.mxu0 0.0
        %958 = vmatpush1.msra.mxu0 %v932
        %959 = vmatprep.subr.mxu0 0.0
        %960 = vmatpush1.msra.mxu0 %v933
        %961 = vmatprep.subr.mxu0 0.0
        %962 = vmatpush1.msra.mxu0 %v934
        %963 = vmatprep.subr.mxu0 0.0
        %964 = vmatpush1.msra.mxu0 %v935
        %965 = vmatprep.subr.mxu0 0.0
        %966 = vmatpush1.msra.mxu0 %v936
        %967 = vmatprep.subr.mxu0 0.0
        %968 = vmatpush1.msra.mxu0 %v937
        %969 = vmatprep.subr.mxu0 0.0
        %970 = vmatpush1.msra.mxu0 %v938
        %971 = vmatprep.subr.mxu0 0.0
        %972 = vmatpush1.msra.mxu0 0.0
        %973 = vmatprep.subr.mxu0 0.0
        %974 = vmatpush1.msra.mxu0 0.0
        %975 = vmatprep.subr.mxu0 0.0
        %976 = vmatpush1.msra.mxu0 0.0
        %977 = vmatprep.subr.mxu0 0.0
        %978 = vmatpush1.msra.mxu0 0.0
        %979 = vmatprep.subr.mxu0 0.0
        %980 = vmatpush1.msra.mxu0 0.0
        %981 = vmatprep.subr.mxu0 0.0
        %982 = vmatpush1.msra.mxu0 0.0
        %983 = vmatprep.subr.mxu0 0.0
        %984 = vmatpush1.msra.mxu0 0.0
        %985 = vmatprep.subr.mxu0 0.0
        %986 = vmatpush1.msra.mxu0 0.0
        %987 = vmatprep.subr.mxu0 0.0
        %988 = vmatpush1.msra.mxu0 0.0
        %989 = vmatprep.subr.mxu0 0.0
        %990 = vmatpush1.msra.mxu0 0.0
        %991 = vmatprep.subr.mxu0 0.0
        %992 = vmatpush1.msra.mxu0 0.0
        %993 = vmatprep.subr.mxu0 0.0
        %994 = vmatpush1.msra.mxu0 0.0
        %995 = vmatprep.subr.mxu0 0.0
        %996 = vmatpush1.msra.mxu0 0.0
        %997 = vmatprep.subr.mxu0 0.0
        %998 = vmatpush1.msra.mxu0 0.0
        %999 = vmatprep.subr.mxu0 0.0
        %1000 = vmatpush1.msra.mxu0 0.0
        %1001 = vmatprep.subr.mxu0 0.0
        %1002 = vmatpush1.msra.mxu0 0.0
        %1003 = vmatprep.mubr.f32.mxu0 0.0
        %1004 = vmatmul.mubr.f32.gmra.mrb[0].mxu0 %v920
        %v1005 = vpop.f32.mrb[0].mxu0
        %v1006 = vadd.f32 0.0, %v1005
        %v1007 = vpop.f32.mrb[0].mxu0
        %1008 = vmatprep.mubr.f32.mxu0 0.0
        %1009 = vmatmul.mubr.f32.gmra.mrb[0].mxu0 %v921
        %v1010 = vpop.f32.mrb[0].mxu0
        %v1011 = vadd.f32 0.0, %v1010
        %v1012 = vpop.f32.mrb[0].mxu0
        %1013 = vdwg.mxu0
        %1014 = vmatprep.subr.mxu0 0.0
        %1015 = vmatpush1.msra.mxu0 %v904
        %1016 = vmatprep.subr.mxu0 0.0
        %1017 = vmatpush1.msra.mxu0 %v905
        %1018 = vmatprep.subr.mxu0 0.0
        %1019 = vmatpush1.msra.mxu0 %v906
        %1020 = vmatprep.subr.mxu0 0.0
        %1021 = vmatpush1.msra.mxu0 %v907
        %1022 = vmatprep.subr.mxu0 0.0
        %1023 = vmatpush1.msra.mxu0 %v908
        %1024 = vmatprep.subr.mxu0 0.0
        %1025 = vmatpush1.msra.mxu0 %v909
        %1026 = vmatprep.subr.mxu0 0.0
        %1027 = vmatpush1.msra.mxu0 %v910
        %1028 = vmatprep.subr.mxu0 0.0
        %1029 = vmatpush1.msra.mxu0 %v911
        %1030 = vmatprep.subr.mxu0 0.0
        %1031 = vmatpush1.msra.mxu0 %v912
        %1032 = vmatprep.subr.mxu0 0.0
        %1033 = vmatpush1.msra.mxu0 %v913
        %1034 = vmatprep.subr.mxu0 0.0
        %1035 = vmatpush1.msra.mxu0 %v914
        %1036 = vmatprep.subr.mxu0 0.0
        %1037 = vmatpush1.msra.mxu0 %v915
        %1038 = vmatprep.subr.mxu0 0.0
        %1039 = vmatpush1.msra.mxu0 %v916
        %1040 = vmatprep.subr.mxu0 0.0
        %1041 = vmatpush1.msra.mxu0 %v917
        %1042 = vmatprep.subr.mxu0 0.0
        %1043 = vmatpush1.msra.mxu0 %v918
        %1044 = vmatprep.subr.mxu0 0.0
        %1045 = vmatpush1.msra.mxu0 %v919
        %1046 = vmatprep.subr.mxu0 0.0
        %1047 = vmatpush1.msra.mxu0 0.0
        %1048 = vmatprep.subr.mxu0 0.0
        %1049 = vmatpush1.msra.mxu0 0.0
        %1050 = vmatprep.subr.mxu0 0.0
        %1051 = vmatpush1.msra.mxu0 0.0
        %1052 = vmatprep.subr.mxu0 0.0
        %1053 = vmatpush1.msra.mxu0 0.0
        %1054 = vmatprep.subr.mxu0 0.0
        %1055 = vmatpush1.msra.mxu0 0.0
        %1056 = vmatprep.subr.mxu0 0.0
        %1057 = vmatpush1.msra.mxu0 0.0
        %1058 = vmatprep.subr.mxu0 0.0
        %1059 = vmatpush1.msra.mxu0 0.0
        %1060 = vmatprep.subr.mxu0 0.0
        %1061 = vmatpush1.msra.mxu0 0.0
        %1062 = vmatprep.subr.mxu0 0.0
        %1063 = vmatpush1.msra.mxu0 0.0
        %1064 = vmatprep.subr.mxu0 0.0
        %1065 = vmatpush1.msra.mxu0 0.0
        %1066 = vmatprep.subr.mxu0 0.0
        %1067 = vmatpush1.msra.mxu0 0.0
        %1068 = vmatprep.subr.mxu0 0.0
        %1069 = vmatpush1.msra.mxu0 0.0
        %1070 = vmatprep.subr.mxu0 0.0
        %1071 = vmatpush1.msra.mxu0 0.0
        %1072 = vmatprep.subr.mxu0 0.0
        %1073 = vmatpush1.msra.mxu0 0.0
        %1074 = vmatprep.subr.mxu0 0.0
        %1075 = vmatpush1.msra.mxu0 0.0
        %1076 = vmatprep.subr.mxu0 0.0
        %1077 = vmatpush1.msra.mxu0 0.0
        %1078 = vmatprep.mubr.f32.mxu0 0.0
        %1079 = vmatmul.mubr.f32.gmra.mrb[0].mxu0 %v902
        %v1080 = vpop.f32.mrb[0].mxu0
        %v1081 = vadd.f32 %v1006, %v1080
        %v1082 = vpop.f32.mrb[0].mxu0
        %1083 = vmatprep.mubr.f32.mxu0 0.0
        %1084 = vmatmul.mubr.f32.gmra.mrb[0].mxu0 %v903
        %v1085 = vpop.f32.mrb[0].mxu0
        %v1086 = vadd.f32 %v1011, %v1085
        %v1087 = vpop.f32.mrb[0].mxu0
        %1088 = vdwg.mxu0
        %v1089 = vld [vmem:[#allocation2 + $0x2] sm:$0xff]
        %v1090 = vld [vmem:[#allocation2 + $0xa] sm:$0xff]
        %s1091 = scalar_lea.vmem %s3, 256
        %v1092 = vld [vmem:[%s1091] sm:$0xff]
        %v1093 = vld [vmem:[%s1091 + $0x8] sm:$0xff]
        %v1094 = vld [vmem:[%s1091 + $0x10] sm:$0xff]
        %v1095 = vld [vmem:[%s1091 + $0x18] sm:$0xff]
        %v1096 = vld [vmem:[%s1091 + $0x20] sm:$0xff]
        %v1097 = vld [vmem:[%s1091 + $0x28] sm:$0xff]
        %v1098 = vld [vmem:[%s1091 + $0x30] sm:$0xff]
        %v1099 = vld [vmem:[%s1091 + $0x38] sm:$0xff]
        %v1100 = vld [vmem:[%s1091 + $0x40] sm:$0xff]
        %v1101 = vld [vmem:[%s1091 + $0x48] sm:$0xff]
        %v1102 = vld [vmem:[%s1091 + $0x50] sm:$0xff]
        %v1103 = vld [vmem:[%s1091 + $0x58] sm:$0xff]
        %v1104 = vld [vmem:[%s1091 + $0x60] sm:$0xff]
        %v1105 = vld [vmem:[%s1091 + $0x68] sm:$0xff]
        %v1106 = vld [vmem:[%s1091 + $0x70] sm:$0xff]
        %v1107 = vld [vmem:[%s1091 + $0x78] sm:$0xff]
        %1108 = vmatprep.subr.mxu0 0.0
        %1109 = vmatpush1.msra.mxu0 %v1092
        %1110 = vmatprep.subr.mxu0 0.0
        %1111 = vmatpush1.msra.mxu0 %v1093
        %1112 = vmatprep.subr.mxu0 0.0
        %1113 = vmatpush1.msra.mxu0 %v1094
        %1114 = vmatprep.subr.mxu0 0.0
        %1115 = vmatpush1.msra.mxu0 %v1095
        %1116 = vmatprep.subr.mxu0 0.0
        %1117 = vmatpush1.msra.mxu0 %v1096
        %1118 = vmatprep.subr.mxu0 0.0
        %1119 = vmatpush1.msra.mxu0 %v1097
        %1120 = vmatprep.subr.mxu0 0.0
        %1121 = vmatpush1.msra.mxu0 %v1098
        %1122 = vmatprep.subr.mxu0 0.0
        %1123 = vmatpush1.msra.mxu0 %v1099
        %1124 = vmatprep.subr.mxu0 0.0
        %1125 = vmatpush1.msra.mxu0 %v1100
        %1126 = vmatprep.subr.mxu0 0.0
        %1127 = vmatpush1.msra.mxu0 %v1101
        %1128 = vmatprep.subr.mxu0 0.0
        %1129 = vmatpush1.msra.mxu0 %v1102
        %1130 = vmatprep.subr.mxu0 0.0
        %1131 = vmatpush1.msra.mxu0 %v1103
        %1132 = vmatprep.subr.mxu0 0.0
        %1133 = vmatpush1.msra.mxu0 %v1104
        %1134 = vmatprep.subr.mxu0 0.0
        %1135 = vmatpush1.msra.mxu0 %v1105
        %1136 = vmatprep.subr.mxu0 0.0
        %1137 = vmatpush1.msra.mxu0 %v1106
        %1138 = vmatprep.subr.mxu0 0.0
        %1139 = vmatpush1.msra.mxu0 %v1107
        %1140 = vmatprep.subr.mxu0 0.0
        %1141 = vmatpush1.msra.mxu0 0.0
        %1142 = vmatprep.subr.mxu0 0.0
        %1143 = vmatpush1.msra.mxu0 0.0
        %1144 = vmatprep.subr.mxu0 0.0
        %1145 = vmatpush1.msra.mxu0 0.0
        %1146 = vmatprep.subr.mxu0 0.0
        %1147 = vmatpush1.msra.mxu0 0.0
        %1148 = vmatprep.subr.mxu0 0.0
        %1149 = vmatpush1.msra.mxu0 0.0
        %1150 = vmatprep.subr.mxu0 0.0
        %1151 = vmatpush1.msra.mxu0 0.0
        %1152 = vmatprep.subr.mxu0 0.0
        %1153 = vmatpush1.msra.mxu0 0.0
        %1154 = vmatprep.subr.mxu0 0.0
        %1155 = vmatpush1.msra.mxu0 0.0
        %1156 = vmatprep.subr.mxu0 0.0
        %1157 = vmatpush1.msra.mxu0 0.0
        %1158 = vmatprep.subr.mxu0 0.0
        %1159 = vmatpush1.msra.mxu0 0.0
        %1160 = vmatprep.subr.mxu0 0.0
        %1161 = vmatpush1.msra.mxu0 0.0
        %1162 = vmatprep.subr.mxu0 0.0
        %1163 = vmatpush1.msra.mxu0 0.0
        %1164 = vmatprep.subr.mxu0 0.0
        %1165 = vmatpush1.msra.mxu0 0.0
        %1166 = vmatprep.subr.mxu0 0.0
        %1167 = vmatpush1.msra.mxu0 0.0
        %1168 = vmatprep.subr.mxu0 0.0
        %1169 = vmatpush1.msra.mxu0 0.0
        %1170 = vmatprep.subr.mxu0 0.0
        %1171 = vmatpush1.msra.mxu0 0.0
        %1172 = vmatprep.mubr.f32.mxu0 0.0
        %1173 = vmatmul.mubr.f32.gmra.mrb[0].mxu0 %v1089
        %v1174 = vpop.f32.mrb[0].mxu0
        %v1175 = vadd.f32 0.0, %v1174
        %v1176 = vpop.f32.mrb[0].mxu0
        %1177 = vmatprep.mubr.f32.mxu0 0.0
        %1178 = vmatmul.mubr.f32.gmra.mrb[0].mxu0 %v1090
        %v1179 = vpop.f32.mrb[0].mxu0
        %v1180 = vadd.f32 0.0, %v1179
        %v1181 = vpop.f32.mrb[0].mxu0
        %1182 = vdwg.mxu0
        %v1183 = vadd.f32 %v1081, %v1175
        %v1184 = vadd.f32 %v1086, %v1180
        %v1186 = vlaneseq
        %v1187 = vshrl.u32 %v1186, 7
        %v1188 = vsub.s32 0, %v1187
        %v1189 = vrot.slane %v901, %v1188
        %v1191 = vadd.f32 %v1183, %v1189
        %v1192 = vadd.f32 %v1184, %v1189
        %vm1193 = vcmask 523264
        %1194 = vst.msk [vmem:[%s284] sm:$0xff] %vm1193, %v1191
        %1195 = vst.msk [vmem:[%s284 + $0x8] sm:$0xff] %vm1193, %v1192
        %s1196 = sand.u32 %s142, 1
        %s1197 = scalar_lea.sflag [#allocation5], %s1196
        %s1198 = sand.u32 %s142, 1
        %s1199 = smul.addr %s1198, 16
        %s1200 = scalar_lea.vmem [#allocation11], %s1199
        // Predicated region
        $region64: #{tpu_custom_call.1} parent=39 // pred_check
          %p1201 = pneg %p152
        $region65: #{tpu_custom_call.1} parent=39 // pred_check_branch
          %1203 = sbr.rel (%p1201) target = $region67
        $region66: #{tpu_custom_call.1} parent=39 // pred_region
          %s1205 = ssub.s32 256, 256
          %1206 = vsyncadd %s1197, %s1205
          %s1207 = smul.addr %s24, 2
          %s1208 = smul.addr %s1207, 128
          %s1209 = scalar_lea.hbm %s5, %s1208
          %s1210 = sshll.u32 %s1200, 4
          %s1211 = int_to_ptr.vmem [resolvable:$true] %s1210
          %1216 = dma.vmem_to_hbm [thread:$0]  %s1211, 256, %s1209, %s1197, 128, 128, 8
        $region67: #{tpu_custom_call.1} parent=39 // pred_fallthru
          _
      $region40: #{tpu_custom_call.1} parent=5 // pred_fallthru
        _
      %p1217 = scmp.le.s32.totalorder 2, %s19
      // Predicated region
      $region68: #{tpu_custom_call.1} parent=5 // pred_check
        %p1218 = pneg %p1217
      $region69: #{tpu_custom_call.1} parent=5 // pred_check_branch
        %1220 = sbr.rel (%p1218) target = $region71
      $region70: #{tpu_custom_call.1} parent=5 // pred_region
        %s1221 = ssub.s32 %s19, 2
        // Predicated region
        $region72: #{tpu_custom_call.1} parent=70 // pred_check
          %p1222 = pneg %p158
        $region73: #{tpu_custom_call.1} parent=70 // pred_check_branch
          %1224 = sbr.rel (%p1222) target = $region75
        $region74: #{tpu_custom_call.1} parent=70 // pred_region
          %s1225 = sand.u32 %s143, 1
          %s1226 = scalar_lea.sflag [#allocation5], %s1225
          %s1227 = sand.u32 %s143, 1
          %s1228 = smul.addr %s1227, 16
          %s1229 = scalar_lea.vmem [#allocation11], %s1228
          %1230 = dma.done %s1226, 256
        $region75: #{tpu_custom_call.1} parent=70 // pred_fallthru
          _
      $region71: #{tpu_custom_call.1} parent=5 // pred_fallthru
        _
    $region6: #{tpu_custom_call.1} parent=1 // loop_footer
      %s23 = sadd.s32 1, %s19
    $region7: #{tpu_custom_call.1} parent=1 // loop_footer_branch
      %18 = sbr.rel target = $region3
    $region8: #{tpu_custom_call.1} parent=1 // loop_exit
      _
    %1231 = vsyncpa [#allocation4], 1
    %s1232 = scalar_lea.sflag [#allocation4], 1
    %1233 = vsyncpa %s1232, 1
    %1234 = vsyncpa [#allocation7], 1
    %1235 = vsyncpa [#allocation10], 1
    %1236 = vsyncpa [#allocation5], 1
    %s1237 = scalar_lea.sflag [#allocation5], 1
    %1238 = vsyncpa %s1237, 1

</llo_original>
